<compile_context>
chip_gen: v7x
topology: tpu7x:2x2x1
jax: 0.10.0
libtpu: 0.0.40
codegen_flags: <defaults>
</compile_context>

<pallas_src>
import jax
import jax.numpy as jnp
from jax.experimental import pallas as pl
from jax.experimental.pallas import tpu as pltpu


def _round_up(x, m):
    return ((x + m - 1) // m) * m


def _vmem_physical_bytes():
    """Physical VMEM per core; conservative 64 MiB (v7x) fallback."""
    try:
        info = pltpu.get_tpu_info()
        for attr in ("vmem_capacity_bytes", "vmem_size_bytes", "vmem_bytes"):
            v = getattr(info, attr, None)
            if v:
                return int(v)
    except Exception:
        pass
    return 64 * 1024 * 1024


def _choose_tiles(batch, seq_len, gate_width):
    """Pick (TB, B_pad, T_TILE, T_pad, vmem_limit).

    TB is a multiple of 128 (batch lives in lanes), capped at 256 to bound
    vreg pressure on the serial recurrence while still filling the 256-wide
    MXU N axis on v6e/v7x.  T_TILE is sized from a generation-aware VMEM
    budget so the double-buffered bf16 (T_TILE, 4H, TB) streamed block fits.
    """
    cap = _vmem_physical_bytes()
    small_vmem = cap <= 96 * 1024 * 1024            # v7x-class parts
    vmem_limit = (48 if small_vmem else 96) * 1024 * 1024
    stream_budget = vmem_limit - 8 * 1024 * 1024    # headroom: whh/scratch/out/etc.

    b_pad128 = _round_up(max(batch, 1), 128)
    tb = min(b_pad128, 256)
    # v7x: guarantee >= 2 batch tiles (2 TensorCores) when the batch allows it.
    if small_vmem and b_pad128 // tb <= 1 and b_pad128 >= 256:
        tb = max(128, _round_up(b_pad128 // 2, 128))
    b_pad = _round_up(b_pad128, tb)

    per_step = 2 * gate_width * tb * 2              # double-buffered bf16 bytes / time step
    t_cap = max(1, stream_budget // per_step)
    t_tile = int(min(seq_len, 32, t_cap))
    t_pad = _round_up(seq_len, t_tile)
    return tb, b_pad, t_tile, t_pad, vmem_limit


def _lstm_dense_kernel(pre_ref, whh_ref, len_ref, dw_ref, db_ref, out_ref,
                       h_ref, c_ref):
    """LSTM recurrence over one (batch-tile, time-tile) block + final dense.

    pre_ref : (T_TILE, 4H, TB) bfloat16   W_ih @ x + (b_ih + b_hh), transposed layout
    whh_ref : (4H, H)          bfloat16   W_hh (PyTorch gate order i, f, g, o)
    len_ref : (1, TB)          int32      sequence lengths
    dw_ref  : (1, H)           float32    dense weight
    db_ref  : (1, 1)           float32    dense bias
    out_ref : (1, TB)          float32    sigmoid(dense(h_{len-1})), lane-dense
    h_ref   : (H, TB)          float32    VMEM scratch, carried across time tiles
    c_ref   : (H, TB)          float32    VMEM scratch, carried across time tiles
    """
    T_TILE, G, TB = pre_ref.shape
    H = G // 4
    t_blk = pl.program_id(1)

    @pl.when(t_blk == 0)
    def _():
        h_ref[...] = jnp.zeros_like(h_ref)
        c_ref[...] = jnp.zeros_like(c_ref)

    whh = whh_ref[...]                                   # (4H, H) bf16, loop-invariant
    # Hoisted broadcast (JAX does not CSE broadcast_in_dim inside unrolled loops).
    lens_b = jnp.broadcast_to(len_ref[...], (H, TB))     # (H, TB) int32
    t0 = t_blk * T_TILE

    def step(lt, carry):
        h, c = carry                                     # (H, TB) f32 each
        t = t0 + lt
        pre = pre_ref[lt].astype(jnp.float32)            # (4H, TB)
        rec = jnp.dot(whh, h.astype(jnp.bfloat16),
                      preferred_element_type=jnp.float32)  # MXU: (4H,H)@(H,TB)
        gates = pre + rec                                # (4H, TB) f32
        # Sublane-dense per-gate activations (sigmoid only on i/f/o, tanh on g).
        i = jax.nn.sigmoid(gates[0 * H:1 * H])
        f = jax.nn.sigmoid(gates[1 * H:2 * H])
        g = jnp.tanh(gates[2 * H:3 * H])
        o = jax.nn.sigmoid(gates[3 * H:4 * H])
        c_new = f * c + i * g
        h_new = o * jnp.tanh(c_new)
        # pack_padded_sequence semantics: state freezes once t >= length, so
        # the final h equals the hidden state at step (length - 1).
        valid = t < lens_b
        h = jnp.where(valid, h_new, h)
        c = jnp.where(valid, c_new, c)
        return (h, c)

    # unroll=2 hides pre loads / scalar overhead without blowing vreg pressure
    # (gates alone is 16-32 live vregs at TB=128-256).
    unroll = True if T_TILE <= 8 else 2
    h, c = jax.lax.fori_loop(0, T_TILE, step, (h_ref[...], c_ref[...]),
                             unroll=unroll)
    h_ref[...] = h
    c_ref[...] = c

    @pl.when(t_blk == pl.num_programs(1) - 1)
    def _():
        # Lane-dense logit: (1, H) @ (H, TB) -> (1, TB).
        logit = jnp.dot(dw_ref[...], h,
                        preferred_element_type=jnp.float32) + db_ref[...]
        out_ref[...] = jax.nn.sigmoid(logit)


class LSTMModelPallas:
    """JAX/Pallas port of LSTM_Model (inference / eval-mode forward)."""

    def __init__(self, vocab_sizes, embed_sizes, num_numerical_features,
                 max_length, lstm_size=32, seed=42):
        assert len(vocab_sizes) == len(embed_sizes)
        self.vocab_sizes = list(vocab_sizes)
        self.embed_sizes = list(embed_sizes)
        self.num_numerical_features = num_numerical_features
        self.max_length = max_length
        self.lstm_size = lstm_size
        F = sum(embed_sizes) + num_numerical_features
        H = lstm_size

        keys = jax.random.split(jax.random.PRNGKey(seed), len(vocab_sizes) + 6)
        # Embedding tables: N(0, 1), like nn.Embedding default.
        self.emb_tables = [
            jax.random.normal(keys[i], (vocab_sizes[i], embed_sizes[i]), jnp.float32)
            for i in range(len(vocab_sizes))
        ]
        k = 1.0 / (H ** 0.5)
        kb = len(vocab_sizes)
        # LSTM params (PyTorch default U(-1/sqrt(H), 1/sqrt(H)), gate order i,f,g,o).
        w_ih = jax.random.uniform(keys[kb + 0], (4 * H, F), jnp.float32, -k, k)
        w_hh = jax.random.uniform(keys[kb + 1], (4 * H, H), jnp.float32, -k, k)
        b_ih = jax.random.uniform(keys[kb + 2], (4 * H,), jnp.float32, -k, k)
        b_hh = jax.random.uniform(keys[kb + 3], (4 * H,), jnp.float32, -k, k)
        self.w_ih = w_ih                                        # (4H, F)
        self.w_hh_bf16 = w_hh.astype(jnp.bfloat16)              # (4H, H) resident bf16
        self.bias = (b_ih + b_hh).reshape(1, 4 * H, 1)          # (1, 4H, 1)
        # Dense layer (H -> 1).
        kd = 1.0 / (H ** 0.5)
        dense_w = jax.random.uniform(keys[kb + 4], (1, H), jnp.float32, -kd, kd)
        dense_b = jax.random.uniform(keys[kb + 5], (1,), jnp.float32, -kd, kd)
        self.dense_w = dense_w                                  # (1, H)
        self.dense_b = dense_b.reshape(1, 1)                    # (1, 1)

    def __call__(self, inputs, sequence_lengths):
        # inputs: (B, T, num_cat + num_num) float32; first num_cat columns are
        # integer category ids stored as floats (as in the PyTorch forward).
        B, T, _ = inputs.shape
        H = self.lstm_size
        G = 4 * H
        ncat = len(self.vocab_sizes)
        cat = inputs[:, :, :ncat].astype(jnp.int32)
        num = inputs[:, :, ncat:].astype(jnp.float32)
        # Embedding lookup (gather) kept in plain JAX glue.
        embs = [tab[cat[:, :, i]] for i, tab in enumerate(self.emb_tables)]
        x = jnp.concatenate(embs + [num], axis=-1)              # (B, T, F)
        # TODO(synk): nn.Dropout is identity in eval mode; training-mode dropout not implemented.

        # Tiling: batch in lanes (TB multiple of 128), time-tiled grid axis.
        TB, B_pad, T_TILE, T_pad, vmem_limit = _choose_tiles(B, T, G)
        x = jnp.pad(x, ((0, B_pad - B), (0, T_pad - T), (0, 0)))
        lens = jnp.pad(sequence_lengths.astype(jnp.int32),
                       (0, B_pad - B)).reshape(1, B_pad)        # padded rows: len 0

        # Hoisted input projection, produced directly in the transposed
        # (T, 4H, B) layout and streamed to the kernel in bf16.
        pre = (jnp.einsum('btf,gf->tgb', x.astype(jnp.float32), self.w_ih,
                          preferred_element_type=jnp.float32)
               + self.bias).astype(jnp.bfloat16)                # (T_pad, 4H, B_pad)

        grid = (B_pad // TB, T_pad // T_TILE)
        out = pl.pallas_call(
            _lstm_dense_kernel,
            out_shape=jax.ShapeDtypeStruct((1, B_pad), jnp.float32),
            grid=grid,
            in_specs=[
                pl.BlockSpec((T_TILE, G, TB), lambda b, t: (t, 0, b)),  # streamed pre (bf16)
                pl.BlockSpec((G, H), lambda b, t: (0, 0)),              # W_hh (resident bf16)
                pl.BlockSpec((1, TB), lambda b, t: (0, b)),             # lengths
                pl.BlockSpec((1, H), lambda b, t: (0, 0)),              # dense W
                pl.BlockSpec((1, 1), lambda b, t: (0, 0)),              # dense b
            ],
            out_specs=pl.BlockSpec((1, TB), lambda b, t: (0, b)),       # lane-dense output
            scratch_shapes=[
                pltpu.VMEM((H, TB), jnp.float32),   # h carried across time tiles
                pltpu.VMEM((H, TB), jnp.float32),   # c carried across time tiles
            ],
            compiler_params=pltpu.CompilerParams(
                dimension_semantics=("parallel", "arbitrary"),
                vmem_limit_bytes=vmem_limit,
            ),
        )(pre, self.w_hh_bf16, lens, self.dense_w, self.dense_b)
        return out[0, :B].reshape(B, 1)


if __name__ == "__main__":
    # Small, module-consistent shapes.
    vocab_sizes = [6, 9]
    embed_sizes = [3, 4]
    num_numerical = 2
    B, T, H = 2, 8, 32

    key = jax.random.PRNGKey(0)
    k_cat0, k_cat1, k_num, k_len = jax.random.split(key, 4)
    cat0 = jax.random.randint(k_cat0, (B, T, 1), 0, vocab_sizes[0])
    cat1 = jax.random.randint(k_cat1, (B, T, 1), 0, vocab_sizes[1])
    num = jax.random.normal(k_num, (B, T, num_numerical), jnp.float32)
    inputs = jnp.concatenate(
        [cat0.astype(jnp.float32), cat1.astype(jnp.float32), num], axis=-1
    )                                                            # (2, 8, 4)
    sequence_lengths = jnp.array([T, 5], dtype=jnp.int32)        # (2,)

    model = LSTMModelPallas(vocab_sizes, embed_sizes, num_numerical,
                            max_length=T, lstm_size=H)
    out = model(inputs, sequence_lengths)
    out = jax.block_until_ready(out)
    assert out.shape == (B, 1)
    assert bool(jnp.all((out >= 0.0) & (out <= 1.0)))
    print("KERNEL_OK")
</pallas_src>

<mosaic_0001>
module attributes {stable_mosaic.version = 11 : i64} {
  func.func @_lstm_dense_kernel(%arg0: i32, %arg1: i32, %arg2: memref<8x128x128xbf16, #tpu.memory_space<vmem>>, %arg3: memref<128x32xbf16, #tpu.memory_space<vmem>>, %arg4: memref<1x128xi32, #tpu.memory_space<vmem>>, %arg5: memref<1x32xf32, #tpu.memory_space<vmem>>, %arg6: memref<1x1xf32, #tpu.memory_space<vmem>>, %arg7: memref<1x128xf32, #tpu.memory_space<vmem>>, %arg8: memref<32x128xf32, #tpu.memory_space<vmem>>, %arg9: memref<32x128xf32, #tpu.memory_space<vmem>>) attributes {dimension_semantics = [#tpu.dimension_semantics<parallel>, #tpu.dimension_semantics<arbitrary>], iteration_bounds = array<i64: 1, 1>, scalar_prefetch = 0 : i64, scratch_operands = 2 : i64, tpu.core_type = #tpu.core_type<tc>, window_params = [{transform_indices = @transform_0, window_bounds = array<i64: 8, 128, 128>}, {pipeline_mode = #tpu.pipeline_mode<synchronous>, transform_indices = @transform_1, window_bounds = array<i64: 128, 32>}, {transform_indices = @transform_2, window_bounds = array<i64: 1, 128>}, {pipeline_mode = #tpu.pipeline_mode<synchronous>, transform_indices = @transform_3, window_bounds = array<i64: 1, 32>}, {pipeline_mode = #tpu.pipeline_mode<synchronous>, transform_indices = @transform_4, window_bounds = array<i64: 1, 1>}, {transform_indices = @transform_5, window_bounds = array<i64: 1, 128>}]} {
    %c0_i32 = arith.constant 0 : i32
    %0 = arith.cmpi eq, %arg1, %c0_i32 : i32
    %1 = arith.extui %0 : i1 to i32
    %c0_i32_0 = arith.constant 0 : i32
    %2 = arith.cmpi ne, %1, %c0_i32_0 : i32
    scf.if %2 {
      %cst_63 = arith.constant 0.000000e+00 : f32
      %311 = vector.broadcast %cst_63 : f32 to vector<32x128xf32>
      %c0_64 = arith.constant 0 : index
      %c0_65 = arith.constant 0 : index
      %312 = vector.load %arg8[%c0_64, %c0_65] : memref<32x128xf32, #tpu.memory_space<vmem>>, vector<32x128xf32>
      tpu.vector_store %arg8[%c0_64, %c0_65], %311 {strides = array<i32>} : memref<32x128xf32, #tpu.memory_space<vmem>>, vector<32x128xf32>,
      %cst_66 = arith.constant 0.000000e+00 : f32
      %313 = vector.broadcast %cst_66 : f32 to vector<32x128xf32>
      %c0_67 = arith.constant 0 : index
      %c0_68 = arith.constant 0 : index
      %314 = vector.load %arg9[%c0_67, %c0_68] : memref<32x128xf32, #tpu.memory_space<vmem>>, vector<32x128xf32>
      tpu.vector_store %arg9[%c0_67, %c0_68], %313 {strides = array<i32>} : memref<32x128xf32, #tpu.memory_space<vmem>>, vector<32x128xf32>,
    } else {
    }
    %c0 = arith.constant 0 : index
    %c0_1 = arith.constant 0 : index
    %3 = vector.load %arg3[%c0, %c0_1] : memref<128x32xbf16, #tpu.memory_space<vmem>>, vector<128x32xbf16>
    %c0_2 = arith.constant 0 : index
    %c0_3 = arith.constant 0 : index
    %4 = vector.load %arg4[%c0_2, %c0_3] : memref<1x128xi32, #tpu.memory_space<vmem>>, vector<1x128xi32>
    %5 = vector.shape_cast %4 : vector<1x128xi32> to vector<1x128xi32>
    %6 = vector.broadcast %5 : vector<1x128xi32> to vector<32x128xi32>
    %c8_i32 = arith.constant 8 : i32
    %7 = arith.muli %arg1, %c8_i32 : i32
    %c0_4 = arith.constant 0 : index
    %c0_5 = arith.constant 0 : index
    %8 = vector.load %arg8[%c0_4, %c0_5] : memref<32x128xf32, #tpu.memory_space<vmem>>, vector<32x128xf32>
    %c0_6 = arith.constant 0 : index
    %c0_7 = arith.constant 0 : index
    %9 = vector.load %arg9[%c0_6, %c0_7] : memref<32x128xf32, #tpu.memory_space<vmem>>, vector<32x128xf32>
    %c0_i32_8 = arith.constant 0 : i32
    %10 = arith.addi %7, %c0_i32_8 : i32
    %11 = arith.index_cast %c0_i32_8 : i32 to index
    %c0_9 = arith.constant 0 : index
    %c0_10 = arith.constant 0 : index
    %12 = vector.load %arg2[%11, %c0_9, %c0_10] : memref<8x128x128xbf16, #tpu.memory_space<vmem>>, vector<1x128x128xbf16>
    %13 = vector.shape_cast %12 : vector<1x128x128xbf16> to vector<128x128xbf16>
    %14 = arith.extf %13 : vector<128x128xbf16> to vector<128x128xf32>
    %15 = arith.truncf %8 : vector<32x128xf32> to vector<32x128xbf16>
    %cst = arith.constant dense<0.000000e+00> : vector<128x128xf32>
    %16 = tpu.matmul %3, %15, %cst {dimension_numbers = #tpu.dot_dimension_numbers<[1], [0], [0], [1], [0, 0, 1, 1], [], []>} : vector<128x32xbf16>, vector<32x128xbf16>, vector<128x128xf32> -> vector<128x128xf32>
    %17 = arith.addf %14, %16 : vector<128x128xf32>
    %18 = vector.extract_strided_slice %17 {offsets = [0, 0], sizes = [32, 128], strides = [1, 1]} : vector<128x128xf32> to vector<32x128xf32>
    %19 = arith.negf %18 : vector<32x128xf32>
    %20 = math.exp %19 : vector<32x128xf32>
    %cst_11 = arith.constant 1.000000e+00 : f32
    %21 = vector.broadcast %cst_11 : f32 to vector<32x128xf32>
    %22 = arith.addf %21, %20 : vector<32x128xf32>
    %23 = arith.divf %21, %22 : vector<32x128xf32>
    %24 = vector.extract_strided_slice %17 {offsets = [32, 0], sizes = [32, 128], strides = [1, 1]} : vector<128x128xf32> to vector<32x128xf32>
    %25 = arith.negf %24 : vector<32x128xf32>
    %26 = math.exp %25 : vector<32x128xf32>
    %cst_12 = arith.constant 1.000000e+00 : f32
    %27 = vector.broadcast %cst_12 : f32 to vector<32x128xf32>
    %28 = arith.addf %27, %26 : vector<32x128xf32>
    %29 = arith.divf %27, %28 : vector<32x128xf32>
    %30 = vector.extract_strided_slice %17 {offsets = [64, 0], sizes = [32, 128], strides = [1, 1]} : vector<128x128xf32> to vector<32x128xf32>
    %31 = math.tanh %30 : vector<32x128xf32>
    %32 = vector.extract_strided_slice %17 {offsets = [96, 0], sizes = [32, 128], strides = [1, 1]} : vector<128x128xf32> to vector<32x128xf32>
    %33 = arith.negf %32 : vector<32x128xf32>
    %34 = math.exp %33 : vector<32x128xf32>
    %cst_13 = arith.constant 1.000000e+00 : f32
    %35 = vector.broadcast %cst_13 : f32 to vector<32x128xf32>
    %36 = arith.addf %35, %34 : vector<32x128xf32>
    %37 = arith.divf %35, %36 : vector<32x128xf32>
    %38 = arith.mulf %29, %9 : vector<32x128xf32>
    %39 = arith.mulf %23, %31 : vector<32x128xf32>
    %40 = arith.addf %38, %39 : vector<32x128xf32>
    %41 = math.tanh %40 : vector<32x128xf32>
    %42 = arith.mulf %37, %41 : vector<32x128xf32>
    %43 = vector.broadcast %10 : i32 to vector<32x128xi32>
    %44 = arith.cmpi slt, %43, %6 : vector<32x128xi32>
    %45 = arith.select %44, %42, %8 : vector<32x128xi1>, vector<32x128xf32>
    %46 = arith.select %44, %40, %9 : vector<32x128xi1>, vector<32x128xf32>
    %c1_i32 = arith.constant 1 : i32
    %47 = arith.addi %7, %c1_i32 : i32
    %48 = arith.index_cast %c1_i32 : i32 to index
    %c0_14 = arith.constant 0 : index
    %c0_15 = arith.constant 0 : index
    %49 = vector.load %arg2[%48, %c0_14, %c0_15] : memref<8x128x128xbf16, #tpu.memory_space<vmem>>, vector<1x128x128xbf16>
    %50 = vector.shape_cast %49 : vector<1x128x128xbf16> to vector<128x128xbf16>
    %51 = arith.extf %50 : vector<128x128xbf16> to vector<128x128xf32>
    %52 = arith.truncf %45 : vector<32x128xf32> to vector<32x128xbf16>
    %cst_16 = arith.constant dense<0.000000e+00> : vector<128x128xf32>
    %53 = tpu.matmul %3, %52, %cst_16 {dimension_numbers = #tpu.dot_dimension_numbers<[1], [0], [0], [1], [0, 0, 1, 1], [], []>} : vector<128x32xbf16>, vector<32x128xbf16>, vector<128x128xf32> -> vector<128x128xf32>
    %54 = arith.addf %51, %53 : vector<128x128xf32>
    %55 = vector.extract_strided_slice %54 {offsets = [0, 0], sizes = [32, 128], strides = [1, 1]} : vector<128x128xf32> to vector<32x128xf32>
    %56 = arith.negf %55 : vector<32x128xf32>
    %57 = math.exp %56 : vector<32x128xf32>
    %cst_17 = arith.constant 1.000000e+00 : f32
    %58 = vector.broadcast %cst_17 : f32 to vector<32x128xf32>
    %59 = arith.addf %58, %57 : vector<32x128xf32>
    %60 = arith.divf %58, %59 : vector<32x128xf32>
    %61 = vector.extract_strided_slice %54 {offsets = [32, 0], sizes = [32, 128], strides = [1, 1]} : vector<128x128xf32> to vector<32x128xf32>
    %62 = arith.negf %61 : vector<32x128xf32>
    %63 = math.exp %62 : vector<32x128xf32>
    %cst_18 = arith.constant 1.000000e+00 : f32
    %64 = vector.broadcast %cst_18 : f32 to vector<32x128xf32>
    %65 = arith.addf %64, %63 : vector<32x128xf32>
    %66 = arith.divf %64, %65 : vector<32x128xf32>
    %67 = vector.extract_strided_slice %54 {offsets = [64, 0], sizes = [32, 128], strides = [1, 1]} : vector<128x128xf32> to vector<32x128xf32>
    %68 = math.tanh %67 : vector<32x128xf32>
    %69 = vector.extract_strided_slice %54 {offsets = [96, 0], sizes = [32, 128], strides = [1, 1]} : vector<128x128xf32> to vector<32x128xf32>
    %70 = arith.negf %69 : vector<32x128xf32>
    %71 = math.exp %70 : vector<32x128xf32>
    %cst_19 = arith.constant 1.000000e+00 : f32
    %72 = vector.broadcast %cst_19 : f32 to vector<32x128xf32>
    %73 = arith.addf %72, %71 : vector<32x128xf32>
    %74 = arith.divf %72, %73 : vector<32x128xf32>
    %75 = arith.mulf %66, %46 : vector<32x128xf32>
    %76 = arith.mulf %60, %68 : vector<32x128xf32>
    %77 = arith.addf %75, %76 : vector<32x128xf32>
    %78 = math.tanh %77 : vector<32x128xf32>
    %79 = arith.mulf %74, %78 : vector<32x128xf32>
    %80 = vector.broadcast %47 : i32 to vector<32x128xi32>
    %81 = arith.cmpi slt, %80, %6 : vector<32x128xi32>
    %82 = arith.select %81, %79, %45 : vector<32x128xi1>, vector<32x128xf32>
    %83 = arith.select %81, %77, %46 : vector<32x128xi1>, vector<32x128xf32>
    %c2_i32 = arith.constant 2 : i32
    %84 = arith.addi %7, %c2_i32 : i32
    %85 = arith.index_cast %c2_i32 : i32 to index
    %c0_20 = arith.constant 0 : index
    %c0_21 = arith.constant 0 : index
    %86 = vector.load %arg2[%85, %c0_20, %c0_21] : memref<8x128x128xbf16, #tpu.memory_space<vmem>>, vector<1x128x128xbf16>
    %87 = vector.shape_cast %86 : vector<1x128x128xbf16> to vector<128x128xbf16>
    %88 = arith.extf %87 : vector<128x128xbf16> to vector<128x128xf32>
    %89 = arith.truncf %82 : vector<32x128xf32> to vector<32x128xbf16>
    %cst_22 = arith.constant dense<0.000000e+00> : vector<128x128xf32>
    %90 = tpu.matmul %3, %89, %cst_22 {dimension_numbers = #tpu.dot_dimension_numbers<[1], [0], [0], [1], [0, 0, 1, 1], [], []>} : vector<128x32xbf16>, vector<32x128xbf16>, vector<128x128xf32> -> vector<128x128xf32>
    %91 = arith.addf %88, %90 : vector<128x128xf32>
    %92 = vector.extract_strided_slice %91 {offsets = [0, 0], sizes = [32, 128], strides = [1, 1]} : vector<128x128xf32> to vector<32x128xf32>
    %93 = arith.negf %92 : vector<32x128xf32>
    %94 = math.exp %93 : vector<32x128xf32>
    %cst_23 = arith.constant 1.000000e+00 : f32
    %95 = vector.broadcast %cst_23 : f32 to vector<32x128xf32>
    %96 = arith.addf %95, %94 : vector<32x128xf32>
    %97 = arith.divf %95, %96 : vector<32x128xf32>
    %98 = vector.extract_strided_slice %91 {offsets = [32, 0], sizes = [32, 128], strides = [1, 1]} : vector<128x128xf32> to vector<32x128xf32>
    %99 = arith.negf %98 : vector<32x128xf32>
    %100 = math.exp %99 : vector<32x128xf32>
    %cst_24 = arith.constant 1.000000e+00 : f32
    %101 = vector.broadcast %cst_24 : f32 to vector<32x128xf32>
    %102 = arith.addf %101, %100 : vector<32x128xf32>
    %103 = arith.divf %101, %102 : vector<32x128xf32>
    %104 = vector.extract_strided_slice %91 {offsets = [64, 0], sizes = [32, 128], strides = [1, 1]} : vector<128x128xf32> to vector<32x128xf32>
    %105 = math.tanh %104 : vector<32x128xf32>
    %106 = vector.extract_strided_slice %91 {offsets = [96, 0], sizes = [32, 128], strides = [1, 1]} : vector<128x128xf32> to vector<32x128xf32>
    %107 = arith.negf %106 : vector<32x128xf32>
    %108 = math.exp %107 : vector<32x128xf32>
    %cst_25 = arith.constant 1.000000e+00 : f32
    %109 = vector.broadcast %cst_25 : f32 to vector<32x128xf32>
    %110 = arith.addf %109, %108 : vector<32x128xf32>
    %111 = arith.divf %109, %110 : vector<32x128xf32>
    %112 = arith.mulf %103, %83 : vector<32x128xf32>
    %113 = arith.mulf %97, %105 : vector<32x128xf32>
    %114 = arith.addf %112, %113 : vector<32x128xf32>
    %115 = math.tanh %114 : vector<32x128xf32>
    %116 = arith.mulf %111, %115 : vector<32x128xf32>
    %117 = vector.broadcast %84 : i32 to vector<32x128xi32>
    %118 = arith.cmpi slt, %117, %6 : vector<32x128xi32>
    %119 = arith.select %118, %116, %82 : vector<32x128xi1>, vector<32x128xf32>
    %120 = arith.select %118, %114, %83 : vector<32x128xi1>, vector<32x128xf32>
    %c3_i32 = arith.constant 3 : i32
    %121 = arith.addi %7, %c3_i32 : i32
    %122 = arith.index_cast %c3_i32 : i32 to index
    %c0_26 = arith.constant 0 : index
    %c0_27 = arith.constant 0 : index
    %123 = vector.load %arg2[%122, %c0_26, %c0_27] : memref<8x128x128xbf16, #tpu.memory_space<vmem>>, vector<1x128x128xbf16>
    %124 = vector.shape_cast %123 : vector<1x128x128xbf16> to vector<128x128xbf16>
    %125 = arith.extf %124 : vector<128x128xbf16> to vector<128x128xf32>
    %126 = arith.truncf %119 : vector<32x128xf32> to vector<32x128xbf16>
    %cst_28 = arith.constant dense<0.000000e+00> : vector<128x128xf32>
    %127 = tpu.matmul %3, %126, %cst_28 {dimension_numbers = #tpu.dot_dimension_numbers<[1], [0], [0], [1], [0, 0, 1, 1], [], []>} : vector<128x32xbf16>, vector<32x128xbf16>, vector<128x128xf32> -> vector<128x128xf32>
    %128 = arith.addf %125, %127 : vector<128x128xf32>
    %129 = vector.extract_strided_slice %128 {offsets = [0, 0], sizes = [32, 128], strides = [1, 1]} : vector<128x128xf32> to vector<32x128xf32>
    %130 = arith.negf %129 : vector<32x128xf32>
    %131 = math.exp %130 : vector<32x128xf32>
    %cst_29 = arith.constant 1.000000e+00 : f32
    %132 = vector.broadcast %cst_29 : f32 to vector<32x128xf32>
    %133 = arith.addf %132, %131 : vector<32x128xf32>
    %134 = arith.divf %132, %133 : vector<32x128xf32>
    %135 = vector.extract_strided_slice %128 {offsets = [32, 0], sizes = [32, 128], strides = [1, 1]} : vector<128x128xf32> to vector<32x128xf32>
    %136 = arith.negf %135 : vector<32x128xf32>
    %137 = math.exp %136 : vector<32x128xf32>
    %cst_30 = arith.constant 1.000000e+00 : f32
    %138 = vector.broadcast %cst_30 : f32 to vector<32x128xf32>
    %139 = arith.addf %138, %137 : vector<32x128xf32>
    %140 = arith.divf %138, %139 : vector<32x128xf32>
    %141 = vector.extract_strided_slice %128 {offsets = [64, 0], sizes = [32, 128], strides = [1, 1]} : vector<128x128xf32> to vector<32x128xf32>
    %142 = math.tanh %141 : vector<32x128xf32>
    %143 = vector.extract_strided_slice %128 {offsets = [96, 0], sizes = [32, 128], strides = [1, 1]} : vector<128x128xf32> to vector<32x128xf32>
    %144 = arith.negf %143 : vector<32x128xf32>
    %145 = math.exp %144 : vector<32x128xf32>
    %cst_31 = arith.constant 1.000000e+00 : f32
    %146 = vector.broadcast %cst_31 : f32 to vector<32x128xf32>
    %147 = arith.addf %146, %145 : vector<32x128xf32>
    %148 = arith.divf %146, %147 : vector<32x128xf32>
    %149 = arith.mulf %140, %120 : vector<32x128xf32>
    %150 = arith.mulf %134, %142 : vector<32x128xf32>
    %151 = arith.addf %149, %150 : vector<32x128xf32>
    %152 = math.tanh %151 : vector<32x128xf32>
    %153 = arith.mulf %148, %152 : vector<32x128xf32>
    %154 = vector.broadcast %121 : i32 to vector<32x128xi32>
    %155 = arith.cmpi slt, %154, %6 : vector<32x128xi32>
    %156 = arith.select %155, %153, %119 : vector<32x128xi1>, vector<32x128xf32>
    %157 = arith.select %155, %151, %120 : vector<32x128xi1>, vector<32x128xf32>
    %c4_i32 = arith.constant 4 : i32
    %158 = arith.addi %7, %c4_i32 : i32
    %159 = arith.index_cast %c4_i32 : i32 to index
    %c0_32 = arith.constant 0 : index
    %c0_33 = arith.constant 0 : index
    %160 = vector.load %arg2[%159, %c0_32, %c0_33] : memref<8x128x128xbf16, #tpu.memory_space<vmem>>, vector<1x128x128xbf16>
    %161 = vector.shape_cast %160 : vector<1x128x128xbf16> to vector<128x128xbf16>
    %162 = arith.extf %161 : vector<128x128xbf16> to vector<128x128xf32>
    %163 = arith.truncf %156 : vector<32x128xf32> to vector<32x128xbf16>
    %cst_34 = arith.constant dense<0.000000e+00> : vector<128x128xf32>
    %164 = tpu.matmul %3, %163, %cst_34 {dimension_numbers = #tpu.dot_dimension_numbers<[1], [0], [0], [1], [0, 0, 1, 1], [], []>} : vector<128x32xbf16>, vector<32x128xbf16>, vector<128x128xf32> -> vector<128x128xf32>
    %165 = arith.addf %162, %164 : vector<128x128xf32>
    %166 = vector.extract_strided_slice %165 {offsets = [0, 0], sizes = [32, 128], strides = [1, 1]} : vector<128x128xf32> to vector<32x128xf32>
    %167 = arith.negf %166 : vector<32x128xf32>
    %168 = math.exp %167 : vector<32x128xf32>
    %cst_35 = arith.constant 1.000000e+00 : f32
    %169 = vector.broadcast %cst_35 : f32 to vector<32x128xf32>
    %170 = arith.addf %169, %168 : vector<32x128xf32>
    %171 = arith.divf %169, %170 : vector<32x128xf32>
    %172 = vector.extract_strided_slice %165 {offsets = [32, 0], sizes = [32, 128], strides = [1, 1]} : vector<128x128xf32> to vector<32x128xf32>
    %173 = arith.negf %172 : vector<32x128xf32>
    %174 = math.exp %173 : vector<32x128xf32>
    %cst_36 = arith.constant 1.000000e+00 : f32
    %175 = vector.broadcast %cst_36 : f32 to vector<32x128xf32>
    %176 = arith.addf %175, %174 : vector<32x128xf32>
    %177 = arith.divf %175, %176 : vector<32x128xf32>
    %178 = vector.extract_strided_slice %165 {offsets = [64, 0], sizes = [32, 128], strides = [1, 1]} : vector<128x128xf32> to vector<32x128xf32>
    %179 = math.tanh %178 : vector<32x128xf32>
    %180 = vector.extract_strided_slice %165 {offsets = [96, 0], sizes = [32, 128], strides = [1, 1]} : vector<128x128xf32> to vector<32x128xf32>
    %181 = arith.negf %180 : vector<32x128xf32>
    %182 = math.exp %181 : vector<32x128xf32>
    %cst_37 = arith.constant 1.000000e+00 : f32
    %183 = vector.broadcast %cst_37 : f32 to vector<32x128xf32>
    %184 = arith.addf %183, %182 : vector<32x128xf32>
    %185 = arith.divf %183, %184 : vector<32x128xf32>
    %186 = arith.mulf %177, %157 : vector<32x128xf32>
    %187 = arith.mulf %171, %179 : vector<32x128xf32>
    %188 = arith.addf %186, %187 : vector<32x128xf32>
    %189 = math.tanh %188 : vector<32x128xf32>
    %190 = arith.mulf %185, %189 : vector<32x128xf32>
    %191 = vector.broadcast %158 : i32 to vector<32x128xi32>
    %192 = arith.cmpi slt, %191, %6 : vector<32x128xi32>
    %193 = arith.select %192, %190, %156 : vector<32x128xi1>, vector<32x128xf32>
    %194 = arith.select %192, %188, %157 : vector<32x128xi1>, vector<32x128xf32>
    %c5_i32 = arith.constant 5 : i32
    %195 = arith.addi %7, %c5_i32 : i32
    %196 = arith.index_cast %c5_i32 : i32 to index
    %c0_38 = arith.constant 0 : index
    %c0_39 = arith.constant 0 : index
    %197 = vector.load %arg2[%196, %c0_38, %c0_39] : memref<8x128x128xbf16, #tpu.memory_space<vmem>>, vector<1x128x128xbf16>
    %198 = vector.shape_cast %197 : vector<1x128x128xbf16> to vector<128x128xbf16>
    %199 = arith.extf %198 : vector<128x128xbf16> to vector<128x128xf32>
    %200 = arith.truncf %193 : vector<32x128xf32> to vector<32x128xbf16>
    %cst_40 = arith.constant dense<0.000000e+00> : vector<128x128xf32>
    %201 = tpu.matmul %3, %200, %cst_40 {dimension_numbers = #tpu.dot_dimension_numbers<[1], [0], [0], [1], [0, 0, 1, 1], [], []>} : vector<128x32xbf16>, vector<32x128xbf16>, vector<128x128xf32> -> vector<128x128xf32>
    %202 = arith.addf %199, %201 : vector<128x128xf32>
    %203 = vector.extract_strided_slice %202 {offsets = [0, 0], sizes = [32, 128], strides = [1, 1]} : vector<128x128xf32> to vector<32x128xf32>
    %204 = arith.negf %203 : vector<32x128xf32>
    %205 = math.exp %204 : vector<32x128xf32>
    %cst_41 = arith.constant 1.000000e+00 : f32
    %206 = vector.broadcast %cst_41 : f32 to vector<32x128xf32>
    %207 = arith.addf %206, %205 : vector<32x128xf32>
    %208 = arith.divf %206, %207 : vector<32x128xf32>
    %209 = vector.extract_strided_slice %202 {offsets = [32, 0], sizes = [32, 128], strides = [1, 1]} : vector<128x128xf32> to vector<32x128xf32>
    %210 = arith.negf %209 : vector<32x128xf32>
    %211 = math.exp %210 : vector<32x128xf32>
    %cst_42 = arith.constant 1.000000e+00 : f32
    %212 = vector.broadcast %cst_42 : f32 to vector<32x128xf32>
    %213 = arith.addf %212, %211 : vector<32x128xf32>
    %214 = arith.divf %212, %213 : vector<32x128xf32>
    %215 = vector.extract_strided_slice %202 {offsets = [64, 0], sizes = [32, 128], strides = [1, 1]} : vector<128x128xf32> to vector<32x128xf32>
    %216 = math.tanh %215 : vector<32x128xf32>
    %217 = vector.extract_strided_slice %202 {offsets = [96, 0], sizes = [32, 128], strides = [1, 1]} : vector<128x128xf32> to vector<32x128xf32>
    %218 = arith.negf %217 : vector<32x128xf32>
    %219 = math.exp %218 : vector<32x128xf32>
    %cst_43 = arith.constant 1.000000e+00 : f32
    %220 = vector.broadcast %cst_43 : f32 to vector<32x128xf32>
    %221 = arith.addf %220, %219 : vector<32x128xf32>
    %222 = arith.divf %220, %221 : vector<32x128xf32>
    %223 = arith.mulf %214, %194 : vector<32x128xf32>
    %224 = arith.mulf %208, %216 : vector<32x128xf32>
    %225 = arith.addf %223, %224 : vector<32x128xf32>
    %226 = math.tanh %225 : vector<32x128xf32>
    %227 = arith.mulf %222, %226 : vector<32x128xf32>
    %228 = vector.broadcast %195 : i32 to vector<32x128xi32>
    %229 = arith.cmpi slt, %228, %6 : vector<32x128xi32>
    %230 = arith.select %229, %227, %193 : vector<32x128xi1>, vector<32x128xf32>
    %231 = arith.select %229, %225, %194 : vector<32x128xi1>, vector<32x128xf32>
    %c6_i32 = arith.constant 6 : i32
    %232 = arith.addi %7, %c6_i32 : i32
    %233 = arith.index_cast %c6_i32 : i32 to index
    %c0_44 = arith.constant 0 : index
    %c0_45 = arith.constant 0 : index
    %234 = vector.load %arg2[%233, %c0_44, %c0_45] : memref<8x128x128xbf16, #tpu.memory_space<vmem>>, vector<1x128x128xbf16>
    %235 = vector.shape_cast %234 : vector<1x128x128xbf16> to vector<128x128xbf16>
    %236 = arith.extf %235 : vector<128x128xbf16> to vector<128x128xf32>
    %237 = arith.truncf %230 : vector<32x128xf32> to vector<32x128xbf16>
    %cst_46 = arith.constant dense<0.000000e+00> : vector<128x128xf32>
    %238 = tpu.matmul %3, %237, %cst_46 {dimension_numbers = #tpu.dot_dimension_numbers<[1], [0], [0], [1], [0, 0, 1, 1], [], []>} : vector<128x32xbf16>, vector<32x128xbf16>, vector<128x128xf32> -> vector<128x128xf32>
    %239 = arith.addf %236, %238 : vector<128x128xf32>
    %240 = vector.extract_strided_slice %239 {offsets = [0, 0], sizes = [32, 128], strides = [1, 1]} : vector<128x128xf32> to vector<32x128xf32>
    %241 = arith.negf %240 : vector<32x128xf32>
    %242 = math.exp %241 : vector<32x128xf32>
    %cst_47 = arith.constant 1.000000e+00 : f32
    %243 = vector.broadcast %cst_47 : f32 to vector<32x128xf32>
    %244 = arith.addf %243, %242 : vector<32x128xf32>
    %245 = arith.divf %243, %244 : vector<32x128xf32>
    %246 = vector.extract_strided_slice %239 {offsets = [32, 0], sizes = [32, 128], strides = [1, 1]} : vector<128x128xf32> to vector<32x128xf32>
    %247 = arith.negf %246 : vector<32x128xf32>
    %248 = math.exp %247 : vector<32x128xf32>
    %cst_48 = arith.constant 1.000000e+00 : f32
    %249 = vector.broadcast %cst_48 : f32 to vector<32x128xf32>
    %250 = arith.addf %249, %248 : vector<32x128xf32>
    %251 = arith.divf %249, %250 : vector<32x128xf32>
    %252 = vector.extract_strided_slice %239 {offsets = [64, 0], sizes = [32, 128], strides = [1, 1]} : vector<128x128xf32> to vector<32x128xf32>
    %253 = math.tanh %252 : vector<32x128xf32>
    %254 = vector.extract_strided_slice %239 {offsets = [96, 0], sizes = [32, 128], strides = [1, 1]} : vector<128x128xf32> to vector<32x128xf32>
    %255 = arith.negf %254 : vector<32x128xf32>
    %256 = math.exp %255 : vector<32x128xf32>
    %cst_49 = arith.constant 1.000000e+00 : f32
    %257 = vector.broadcast %cst_49 : f32 to vector<32x128xf32>
    %258 = arith.addf %257, %256 : vector<32x128xf32>
    %259 = arith.divf %257, %258 : vector<32x128xf32>
    %260 = arith.mulf %251, %231 : vector<32x128xf32>
    %261 = arith.mulf %245, %253 : vector<32x128xf32>
    %262 = arith.addf %260, %261 : vector<32x128xf32>
    %263 = math.tanh %262 : vector<32x128xf32>
    %264 = arith.mulf %259, %263 : vector<32x128xf32>
    %265 = vector.broadcast %232 : i32 to vector<32x128xi32>
    %266 = arith.cmpi slt, %265, %6 : vector<32x128xi32>
    %267 = arith.select %266, %264, %230 : vector<32x128xi1>, vector<32x128xf32>
    %268 = arith.select %266, %262, %231 : vector<32x128xi1>, vector<32x128xf32>
    %c7_i32 = arith.constant 7 : i32
    %269 = arith.addi %7, %c7_i32 : i32
    %270 = arith.index_cast %c7_i32 : i32 to index
    %c0_50 = arith.constant 0 : index
    %c0_51 = arith.constant 0 : index
    %271 = vector.load %arg2[%270, %c0_50, %c0_51] : memref<8x128x128xbf16, #tpu.memory_space<vmem>>, vector<1x128x128xbf16>
    %272 = vector.shape_cast %271 : vector<1x128x128xbf16> to vector<128x128xbf16>
    %273 = arith.extf %272 : vector<128x128xbf16> to vector<128x128xf32>
    %274 = arith.truncf %267 : vector<32x128xf32> to vector<32x128xbf16>
    %cst_52 = arith.constant dense<0.000000e+00> : vector<128x128xf32>
    %275 = tpu.matmul %3, %274, %cst_52 {dimension_numbers = #tpu.dot_dimension_numbers<[1], [0], [0], [1], [0, 0, 1, 1], [], []>} : vector<128x32xbf16>, vector<32x128xbf16>, vector<128x128xf32> -> vector<128x128xf32>
    %276 = arith.addf %273, %275 : vector<128x128xf32>
    %277 = vector.extract_strided_slice %276 {offsets = [0, 0], sizes = [32, 128], strides = [1, 1]} : vector<128x128xf32> to vector<32x128xf32>
    %278 = arith.negf %277 : vector<32x128xf32>
    %279 = math.exp %278 : vector<32x128xf32>
    %cst_53 = arith.constant 1.000000e+00 : f32
    %280 = vector.broadcast %cst_53 : f32 to vector<32x128xf32>
    %281 = arith.addf %280, %279 : vector<32x128xf32>
    %282 = arith.divf %280, %281 : vector<32x128xf32>
    %283 = vector.extract_strided_slice %276 {offsets = [32, 0], sizes = [32, 128], strides = [1, 1]} : vector<128x128xf32> to vector<32x128xf32>
    %284 = arith.negf %283 : vector<32x128xf32>
    %285 = math.exp %284 : vector<32x128xf32>
    %cst_54 = arith.constant 1.000000e+00 : f32
    %286 = vector.broadcast %cst_54 : f32 to vector<32x128xf32>
    %287 = arith.addf %286, %285 : vector<32x128xf32>
    %288 = arith.divf %286, %287 : vector<32x128xf32>
    %289 = vector.extract_strided_slice %276 {offsets = [64, 0], sizes = [32, 128], strides = [1, 1]} : vector<128x128xf32> to vector<32x128xf32>
    %290 = math.tanh %289 : vector<32x128xf32>
    %291 = vector.extract_strided_slice %276 {offsets = [96, 0], sizes = [32, 128], strides = [1, 1]} : vector<128x128xf32> to vector<32x128xf32>
    %292 = arith.negf %291 : vector<32x128xf32>
    %293 = math.exp %292 : vector<32x128xf32>
    %cst_55 = arith.constant 1.000000e+00 : f32
    %294 = vector.broadcast %cst_55 : f32 to vector<32x128xf32>
    %295 = arith.addf %294, %293 : vector<32x128xf32>
    %296 = arith.divf %294, %295 : vector<32x128xf32>
    %297 = arith.mulf %288, %268 : vector<32x128xf32>
    %298 = arith.mulf %282, %290 : vector<32x128xf32>
    %299 = arith.addf %297, %298 : vector<32x128xf32>
    %300 = math.tanh %299 : vector<32x128xf32>
    %301 = arith.mulf %296, %300 : vector<32x128xf32>
    %302 = vector.broadcast %269 : i32 to vector<32x128xi32>
    %303 = arith.cmpi slt, %302, %6 : vector<32x128xi32>
    %304 = arith.select %303, %301, %267 : vector<32x128xi1>, vector<32x128xf32>
    %305 = arith.select %303, %299, %268 : vector<32x128xi1>, vector<32x128xf32>
    %c8_i32_56 = arith.constant 8 : i32
    %c0_57 = arith.constant 0 : index
    %c0_58 = arith.constant 0 : index
    %306 = vector.load %arg8[%c0_57, %c0_58] : memref<32x128xf32, #tpu.memory_space<vmem>>, vector<32x128xf32>
    tpu.vector_store %arg8[%c0_57, %c0_58], %304 {strides = array<i32>} : memref<32x128xf32, #tpu.memory_space<vmem>>, vector<32x128xf32>,
    %c0_59 = arith.constant 0 : index
    %c0_60 = arith.constant 0 : index
    %307 = vector.load %arg9[%c0_59, %c0_60] : memref<32x128xf32, #tpu.memory_space<vmem>>, vector<32x128xf32>
    tpu.vector_store %arg9[%c0_59, %c0_60], %305 {strides = array<i32>} : memref<32x128xf32, #tpu.memory_space<vmem>>, vector<32x128xf32>,
    %c0_i32_61 = arith.constant 0 : i32
    %308 = arith.cmpi eq, %arg1, %c0_i32_61 : i32
    %309 = arith.extui %308 : i1 to i32
    %c0_i32_62 = arith.constant 0 : i32
    %310 = arith.cmpi ne, %309, %c0_i32_62 : i32
    scf.if %310 {
      %c0_63 = arith.constant 0 : index
      %c0_64 = arith.constant 0 : index
      %311 = vector.load %arg5[%c0_63, %c0_64] : memref<1x32xf32, #tpu.memory_space<vmem>>, vector<1x32xf32>
      %cst_65 = arith.constant dense<0.000000e+00> : vector<1x128xf32>
      %312 = tpu.matmul %311, %304, %cst_65 {dimension_numbers = #tpu.dot_dimension_numbers<[1], [0], [0], [1], [0, 0, 1, 1], [], []>} : vector<1x32xf32>, vector<32x128xf32>, vector<1x128xf32> -> vector<1x128xf32>
      %c0_66 = arith.constant 0 : index
      %c0_67 = arith.constant 0 : index
      %313 = vector.load %arg6[%c0_66, %c0_67] : memref<1x1xf32, #tpu.memory_space<vmem>>, vector<1x1xf32>
      %314 = vector.broadcast %313 : vector<1x1xf32> to vector<1x128xf32>
      %315 = arith.addf %312, %314 : vector<1x128xf32>
      %316 = arith.negf %315 : vector<1x128xf32>
      %317 = math.exp %316 : vector<1x128xf32>
      %cst_68 = arith.constant 1.000000e+00 : f32
      %318 = vector.broadcast %cst_68 : f32 to vector<1x128xf32>
      %319 = arith.addf %318, %317 : vector<1x128xf32>
      %320 = arith.divf %318, %319 : vector<1x128xf32>
      %c0_69 = arith.constant 0 : index
      %c0_70 = arith.constant 0 : index
      %321 = vector.load %arg7[%c0_69, %c0_70] : memref<1x128xf32, #tpu.memory_space<vmem>>, vector<1x128xf32>
      tpu.vector_store %arg7[%c0_69, %c0_70], %320 {strides = array<i32>} : memref<1x128xf32, #tpu.memory_space<vmem>>, vector<1x128xf32>,
    } else {
    }
    return
  }
  func.func @transform_0(%arg0: i32, %arg1: i32) -> (i32, i32, i32) {
    %c0_i32 = arith.constant 0 : i32
    %c0_i32_0 = arith.constant 0 : i32
    return %arg1, %c0_i32, %arg0 : i32, i32, i32
  }
  func.func @transform_1(%arg0: i32, %arg1: i32) -> (i32, i32) {
    %c0_i32 = arith.constant 0 : i32
    %c0_i32_0 = arith.constant 0 : i32
    %c0_i32_1 = arith.constant 0 : i32
    return %c0_i32, %c0_i32_0 : i32, i32
  }
  func.func @transform_2(%arg0: i32, %arg1: i32) -> (i32, i32) {
    %c0_i32 = arith.constant 0 : i32
    %c0_i32_0 = arith.constant 0 : i32
    return %c0_i32, %arg0 : i32, i32
  }
  func.func @transform_3(%arg0: i32, %arg1: i32) -> (i32, i32) {
    %c0_i32 = arith.constant 0 : i32
    %c0_i32_0 = arith.constant 0 : i32
    %c0_i32_1 = arith.constant 0 : i32
    return %c0_i32, %c0_i32_0 : i32, i32
  }
  func.func @transform_4(%arg0: i32, %arg1: i32) -> (i32, i32) {
    %c0_i32 = arith.constant 0 : i32
    %c0_i32_0 = arith.constant 0 : i32
    %c0_i32_1 = arith.constant 0 : i32
    return %c0_i32, %c0_i32_0 : i32, i32
  }
  func.func @transform_5(%arg0: i32, %arg1: i32) -> (i32, i32) {
    %c0_i32 = arith.constant 0 : i32
    %c0_i32_0 = arith.constant 0 : i32
    return %c0_i32, %arg0 : i32, i32
  }
}

</mosaic_0001>

<llo_original>
// kernel: tpu_custom_call.1
$region0: #{tpu_custom_call.1}
  #allocation0 [shape = 'u32[]', space=smem, size = 0x4, offset = 0x4, fixed_abs, tag = 'smem constant byte address 0x4 - core index']
  #allocation1 [shape = 'u32[144,128]{1,0:T(1,128)}', space=vmem, size = 0x12000, scoped, tag = 'internal scratch']
  #allocation2 [shape = 'f32[32,128]{1,0:T(8,128)}', space=vmem, size = 0x4000, scoped, tag = 'scratch operand']
  #allocation3 [shape = 'f32[32,128]{1,0:T(8,128)}', space=vmem, size = 0x4000, scoped, tag = 'scratch operand']
  #allocation4 [shape = 'f32[1,1]{1,0:T(1,128)S(1)}', space=vmem, size = 0x200, scoped, tag = 'scoped memory for tpu_custom_call.1']
  %s0 = inlined_call_operand.hbm [shape: bf16[8,128,128], index: 0, kind: input, shape index: {}]
  %s1 = inlined_call_operand.vmem [shape: bf16[128,32], index: 1, kind: input, shape index: {}]
  %s2 = inlined_call_operand.vmem [shape: s32[1,128], index: 2, kind: input, shape index: {}]
  %s3 = inlined_call_operand.vmem [shape: f32[1,32], index: 3, kind: input, shape index: {}]
  %s4 = inlined_call_operand.<no memory space> [shape: f32[1,1], index: 4, kind: input, shape index: {}]
  %s5 = inlined_call_operand.hbm [shape: f32[1,128], index: 5, kind: output, shape index: {}]
  %s6 = sld [smem:[#allocation0]]
  $region42: #{tpu_custom_call.1} parent=0
    _
  %s8 = ssub.s32 1, %s6
  %s9 = scalar_select 0, %s8, %s6
  %v10 = vstv %s4
  %11 = vst [vmem:[#allocation4] sm:$0x1] %v10
  $region1: #{tpu_custom_call.1} parent=0
    #allocation5 [shape = 'u8[262144]{0}', space=vmem, size = 0x40000, scoped, tag = 'input window, operand 0, single buffered']
    #allocation6 [shape = 's32[1]{0}', space=sflag, size = 0x4, scoped, tag = 'scoped memory for tpu_custom_call.1']
    #allocation7 [shape = 's32[1]{0}', space=sflag, size = 0x4, scoped, tag = 'scoped memory for tpu_custom_call.1']
    #allocation8 [shape = 'u8[512]{0}', space=vmem, size = 0x400, scoped, tag = 'output window, operand 0, single buffered']
    %12 = vsyncpa [#allocation6], 0
    %13 = vsyncpa [#allocation7], 0
    // Predicated region
    $region2: #{tpu_custom_call.1} parent=1 // pred_check
      _
    $region3: #{tpu_custom_call.1} parent=1 // pred_check_branch
      %15 = sbr.rel (0) target = $region5
    $region4: #{tpu_custom_call.1} parent=1 // pred_region
      %s17 = ssub.s32 8192, 8192
      %18 = vsyncadd [#allocation6], %s17
      %s19 = sshll.u32 [#allocation5], 4
      %s20 = int_to_ptr.vmem [resolvable:$true] %s19
      %25 = dma.hbm_to_vmem [thread:$0]  %s0, 8192, %s20, [#allocation6], 64, 64, 4
    $region5: #{tpu_custom_call.1} parent=1 // pred_fallthru
      _
    // Predicated region
    $region6: #{tpu_custom_call.1} parent=1 // pred_check
      _
    $region7: #{tpu_custom_call.1} parent=1 // pred_check_branch
      %27 = sbr.rel (0) target = $region9
    $region8: #{tpu_custom_call.1} parent=1 // pred_region
      _
    $region9: #{tpu_custom_call.1} parent=1 // pred_fallthru
      _
    // Predicated region
    $region10: #{tpu_custom_call.1} parent=1 // pred_check
      _
    $region11: #{tpu_custom_call.1} parent=1 // pred_check_branch
      %29 = sbr.rel (0) target = $region13
    $region12: #{tpu_custom_call.1} parent=1 // pred_region
      _
    $region13: #{tpu_custom_call.1} parent=1 // pred_fallthru
      _
    // Predicated region
    $region14: #{tpu_custom_call.1} parent=1 // pred_check
      _
    $region15: #{tpu_custom_call.1} parent=1 // pred_check_branch
      %31 = sbr.rel (0) target = $region17
    $region16: #{tpu_custom_call.1} parent=1 // pred_region
      _
    $region17: #{tpu_custom_call.1} parent=1 // pred_fallthru
      _
    // Predicated region
    $region18: #{tpu_custom_call.1} parent=1 // pred_check
      _
    $region19: #{tpu_custom_call.1} parent=1 // pred_check_branch
      %33 = sbr.rel (0) target = $region21
    $region20: #{tpu_custom_call.1} parent=1 // pred_region
      _
    $region21: #{tpu_custom_call.1} parent=1 // pred_fallthru
      _
    // Predicated region
    $region22: #{tpu_custom_call.1} parent=1 // pred_check
      _
    $region23: #{tpu_custom_call.1} parent=1 // pred_check_branch
      %35 = sbr.rel (0) target = $region25
    $region24: #{tpu_custom_call.1} parent=1 // pred_region
      %36 = dma.done [#allocation6], 8192
    $region25: #{tpu_custom_call.1} parent=1 // pred_fallthru
      _
    %p38 = scmp.eq.s32.totalorder 0, 0
    // Predicated region
    $region26: #{tpu_custom_call.1} parent=1 // pred_check
      %p39 = pneg %p38
    $region27: #{tpu_custom_call.1} parent=1 // pred_check_branch
      %41 = sbr.rel (%p39) target = $region29
    $region28: #{tpu_custom_call.1} parent=1 // pred_region
      %42 = vst [vmem:[#allocation2] sm:$0xff] 0.0
      %43 = vst [vmem:[#allocation2 + $0x8] sm:$0xff] 0.0
      %44 = vst [vmem:[#allocation2 + $0x10] sm:$0xff] 0.0
      %45 = vst [vmem:[#allocation2 + $0x18] sm:$0xff] 0.0
      %46 = vst [vmem:[#allocation3] sm:$0xff] 0.0
      %47 = vst [vmem:[#allocation3 + $0x8] sm:$0xff] 0.0
      %48 = vst [vmem:[#allocation3 + $0x10] sm:$0xff] 0.0
      %49 = vst [vmem:[#allocation3 + $0x18] sm:$0xff] 0.0
    $region29: #{tpu_custom_call.1} parent=1 // pred_fallthru
      _
    %v50 = vld [vmem:[%s1] sm:$0xf]
    %v51 = vld [vmem:[%s1 + $0x4] sm:$0xf]
    %v52 = vld [vmem:[%s1 + $0x8] sm:$0xf]
    %v53 = vld [vmem:[%s1 + $0xc] sm:$0xf]
    %v54 = vld [vmem:[%s1 + $0x10] sm:$0xf]
    %v55 = vld [vmem:[%s1 + $0x14] sm:$0xf]
    %v56 = vld [vmem:[%s1 + $0x18] sm:$0xf]
    %v57 = vld [vmem:[%s1 + $0x1c] sm:$0xf]
    %v58 = vld [vmem:[%s1 + $0x20] sm:$0xf]
    %v59 = vld [vmem:[%s1 + $0x24] sm:$0xf]
    %v60 = vld [vmem:[%s1 + $0x28] sm:$0xf]
    %v61 = vld [vmem:[%s1 + $0x2c] sm:$0xf]
    %v62 = vld [vmem:[%s1 + $0x30] sm:$0xf]
    %v63 = vld [vmem:[%s1 + $0x34] sm:$0xf]
    %v64 = vld [vmem:[%s1 + $0x38] sm:$0xf]
    %v65 = vld [vmem:[%s1 + $0x3c] sm:$0xf]
    %v66 = vld [vmem:[%s2] sm:$0x1]
    %v67 = vlaneseq
    %v68 = vshrl.u32 %v67, 7
    %v69 = vsub.s32 0, %v68
    %v70 = vrot.slane %v66, %v69
    %s71 = smul.u32 0, 8
    %v72 = vld [vmem:[#allocation2] sm:$0xff]
    %v73 = vld [vmem:[#allocation2 + $0x8] sm:$0xff]
    %v74 = vld [vmem:[#allocation2 + $0x10] sm:$0xff]
    %v75 = vld [vmem:[#allocation2 + $0x18] sm:$0xff]
    %v76 = vld [vmem:[#allocation3] sm:$0xff]
    %v77 = vld [vmem:[#allocation3 + $0x8] sm:$0xff]
    %v78 = vld [vmem:[#allocation3 + $0x10] sm:$0xff]
    %v79 = vld [vmem:[#allocation3 + $0x18] sm:$0xff]
    %v80 = vld [vmem:[#allocation5] sm:$0xf]
    %v81 = vld [vmem:[#allocation5 + $0x4] sm:$0xf]
    %v82 = vld [vmem:[#allocation5 + $0x8] sm:$0xf]
    %v83 = vld [vmem:[#allocation5 + $0xc] sm:$0xf]
    %v84 = vld [vmem:[#allocation5 + $0x10] sm:$0xf]
    %v85 = vld [vmem:[#allocation5 + $0x14] sm:$0xf]
    %v86 = vld [vmem:[#allocation5 + $0x18] sm:$0xf]
    %v87 = vld [vmem:[#allocation5 + $0x1c] sm:$0xf]
    %v88 = vld [vmem:[#allocation5 + $0x20] sm:$0xf]
    %v89 = vld [vmem:[#allocation5 + $0x24] sm:$0xf]
    %v90 = vld [vmem:[#allocation5 + $0x28] sm:$0xf]
    %v91 = vld [vmem:[#allocation5 + $0x2c] sm:$0xf]
    %v92 = vld [vmem:[#allocation5 + $0x30] sm:$0xf]
    %v93 = vld [vmem:[#allocation5 + $0x34] sm:$0xf]
    %v94 = vld [vmem:[#allocation5 + $0x38] sm:$0xf]
    %v95 = vld [vmem:[#allocation5 + $0x3c] sm:$0xf]
    %v96 = vunpack.c.l.bf16 %v80
    %v97 = vunpack.c.l.bf16 %v81
    %v98 = vunpack.c.l.bf16 %v82
    %v99 = vunpack.c.l.bf16 %v83
    %v100 = vunpack.c.l.bf16 %v84
    %v101 = vunpack.c.l.bf16 %v85
    %v102 = vunpack.c.l.bf16 %v86
    %v103 = vunpack.c.l.bf16 %v87
    %v104 = vunpack.c.l.bf16 %v88
    %v105 = vunpack.c.l.bf16 %v89
    %v106 = vunpack.c.l.bf16 %v90
    %v107 = vunpack.c.l.bf16 %v91
    %v108 = vunpack.c.l.bf16 %v92
    %v109 = vunpack.c.l.bf16 %v93
    %v110 = vunpack.c.l.bf16 %v94
    %v111 = vunpack.c.l.bf16 %v95
    %v112 = vpack.c.bf16 %v73, %v72
    %v113 = vpack.c.bf16 %v75, %v74
    %v130 = vunpack.c.l.b16 %v50
    %v131 = vunpack.c.l.b16 %v51
    %v132 = vunpack.c.l.b16 %v52
    %v133 = vunpack.c.l.b16 %v53
    %v134 = vunpack.c.l.b16 %v54
    %v135 = vunpack.c.l.b16 %v55
    %v136 = vunpack.c.l.b16 %v56
    %v137 = vunpack.c.l.b16 %v57
    %v138 = vunpack.c.l.b16 %v58
    %v139 = vunpack.c.l.b16 %v59
    %v140 = vunpack.c.l.b16 %v60
    %v141 = vunpack.c.l.b16 %v61
    %v142 = vunpack.c.l.b16 %v62
    %v143 = vunpack.c.l.b16 %v63
    %v144 = vunpack.c.l.b16 %v64
    %v145 = vunpack.c.l.b16 %v65
    %v146 = vpack.c.b16 %v131, %v130
    %v147 = vpack.c.b16 %v133, %v132
    %v148 = vpack.c.b16 %v135, %v134
    %v149 = vpack.c.b16 %v137, %v136
    %v150 = vpack.c.b16 %v139, %v138
    %v151 = vpack.c.b16 %v141, %v140
    %v152 = vpack.c.b16 %v143, %v142
    %v153 = vpack.c.b16 %v145, %v144
    %vm154 = vcmask 261120
    %v156 = vsel %vm154, %v146, 0
    %v159 = vsel %vm154, %v147, 0
    %v162 = vsel %vm154, %v148, 0
    %v165 = vsel %vm154, %v149, 0
    %v168 = vsel %vm154, %v150, 0
    %v171 = vsel %vm154, %v151, 0
    %v174 = vsel %vm154, %v152, 0
    %v177 = vsel %vm154, %v153, 0
    %179 = vmatprep.subr.bf16.mxu0 0
    %180 = vmatpush1.bf16.msra.mxu0 %v112
    %181 = vmatprep.subr.bf16.mxu0 0
    %182 = vmatpush1.bf16.msra.mxu0 %v113
    %183 = vmatprep.subr.bf16.mxu0 0
    %184 = vmatpush1.bf16.msra.mxu0 0
    %185 = vmatprep.subr.bf16.mxu0 0
    %186 = vmatpush1.bf16.msra.mxu0 0
    %187 = vmatprep.subr.bf16.mxu0 0
    %188 = vmatpush1.bf16.msra.mxu0 0
    %189 = vmatprep.subr.bf16.mxu0 0
    %190 = vmatpush1.bf16.msra.mxu0 0
    %191 = vmatprep.subr.bf16.mxu0 0
    %192 = vmatpush1.bf16.msra.mxu0 0
    %193 = vmatprep.subr.bf16.mxu0 0
    %194 = vmatpush1.bf16.msra.mxu0 0
    %195 = vmatprep.subr.bf16.mxu0 0
    %196 = vmatpush1.bf16.msra.mxu0 0
    %197 = vmatprep.subr.bf16.mxu0 0
    %198 = vmatpush1.bf16.msra.mxu0 0
    %199 = vmatprep.subr.bf16.mxu0 0
    %200 = vmatpush1.bf16.msra.mxu0 0
    %201 = vmatprep.subr.bf16.mxu0 0
    %202 = vmatpush1.bf16.msra.mxu0 0
    %203 = vmatprep.subr.bf16.mxu0 0
    %204 = vmatpush1.bf16.msra.mxu0 0
    %205 = vmatprep.subr.bf16.mxu0 0
    %206 = vmatpush1.bf16.msra.mxu0 0
    %207 = vmatprep.subr.bf16.mxu0 0
    %208 = vmatpush1.bf16.msra.mxu0 0
    %209 = vmatprep.subr.bf16.mxu0 0
    %210 = vmatpush1.bf16.msra.mxu0 0
    %211 = vmatprep.mubr.bf16.mxu0 0
    %212 = vmatmul.mubr.bf16.gmra.mrb[0].mxu0 %v156
    %v213 = vpop.f32.mrb[0].mxu0
    %v214 = vadd.f32 0.0, %v213
    %v215 = vpop.f32.mrb[0].mxu0
    %v216 = vpop.f32.mrb[0].mxu0
    %v217 = vadd.f32 0.0, %v216
    %v218 = vpop.f32.mrb[0].mxu0
    %219 = vmatprep.mubr.bf16.mxu0 0
    %220 = vmatmul.mubr.bf16.gmra.mrb[0].mxu0 %v159
    %v221 = vpop.f32.mrb[0].mxu0
    %v222 = vadd.f32 0.0, %v221
    %v223 = vpop.f32.mrb[0].mxu0
    %v224 = vpop.f32.mrb[0].mxu0
    %v225 = vadd.f32 0.0, %v224
    %v226 = vpop.f32.mrb[0].mxu0
    %227 = vmatprep.mubr.bf16.mxu0 0
    %228 = vmatmul.mubr.bf16.gmra.mrb[0].mxu0 %v162
    %v229 = vpop.f32.mrb[0].mxu0
    %v230 = vadd.f32 0.0, %v229
    %v231 = vpop.f32.mrb[0].mxu0
    %v232 = vpop.f32.mrb[0].mxu0
    %v233 = vadd.f32 0.0, %v232
    %v234 = vpop.f32.mrb[0].mxu0
    %235 = vmatprep.mubr.bf16.mxu0 0
    %236 = vmatmul.mubr.bf16.gmra.mrb[0].mxu0 %v165
    %v237 = vpop.f32.mrb[0].mxu0
    %v238 = vadd.f32 0.0, %v237
    %v239 = vpop.f32.mrb[0].mxu0
    %v240 = vpop.f32.mrb[0].mxu0
    %v241 = vadd.f32 0.0, %v240
    %v242 = vpop.f32.mrb[0].mxu0
    %243 = vmatprep.mubr.bf16.mxu0 0
    %244 = vmatmul.mubr.bf16.gmra.mrb[0].mxu0 %v168
    %v245 = vpop.f32.mrb[0].mxu0
    %v246 = vadd.f32 0.0, %v245
    %v247 = vpop.f32.mrb[0].mxu0
    %v248 = vpop.f32.mrb[0].mxu0
    %v249 = vadd.f32 0.0, %v248
    %v250 = vpop.f32.mrb[0].mxu0
    %251 = vmatprep.mubr.bf16.mxu0 0
    %252 = vmatmul.mubr.bf16.gmra.mrb[0].mxu0 %v171
    %v253 = vpop.f32.mrb[0].mxu0
    %v254 = vadd.f32 0.0, %v253
    %v255 = vpop.f32.mrb[0].mxu0
    %v256 = vpop.f32.mrb[0].mxu0
    %v257 = vadd.f32 0.0, %v256
    %v258 = vpop.f32.mrb[0].mxu0
    %259 = vmatprep.mubr.bf16.mxu0 0
    %260 = vmatmul.mubr.bf16.gmra.mrb[0].mxu0 %v174
    %v261 = vpop.f32.mrb[0].mxu0
    %v262 = vadd.f32 0.0, %v261
    %v263 = vpop.f32.mrb[0].mxu0
    %v264 = vpop.f32.mrb[0].mxu0
    %v265 = vadd.f32 0.0, %v264
    %v266 = vpop.f32.mrb[0].mxu0
    %267 = vmatprep.mubr.bf16.mxu0 0
    %268 = vmatmul.mubr.bf16.gmra.mrb[0].mxu0 %v177
    %v269 = vpop.f32.mrb[0].mxu0
    %v270 = vadd.f32 0.0, %v269
    %v271 = vpop.f32.mrb[0].mxu0
    %v272 = vpop.f32.mrb[0].mxu0
    %v273 = vadd.f32 0.0, %v272
    %v274 = vpop.f32.mrb[0].mxu0
    %275 = vdwg.mxu0
    %v276 = vadd.f32 %v96, %v214
    %v277 = vadd.f32 %v97, %v217
    %v278 = vadd.f32 %v98, %v222
    %v279 = vadd.f32 %v99, %v225
    %v280 = vadd.f32 %v100, %v230
    %v281 = vadd.f32 %v101, %v233
    %v282 = vadd.f32 %v102, %v238
    %v283 = vadd.f32 %v103, %v241
    %v284 = vadd.f32 %v104, %v246
    %v285 = vadd.f32 %v105, %v249
    %v286 = vadd.f32 %v106, %v254
    %v287 = vadd.f32 %v107, %v257
    %v288 = vadd.f32 %v108, %v262
    %v289 = vadd.f32 %v109, %v265
    %v290 = vadd.f32 %v110, %v270
    %v291 = vadd.f32 %v111, %v273
    %v292 = vxor.u32 %v276, 2147483648
    %v293 = vxor.u32 %v277, 2147483648
    %v294 = vxor.u32 %v278, 2147483648
    %v295 = vxor.u32 %v279, 2147483648
    %v296 = vmul.f32 %v292, 1.442695
    %v297 = vpow.pop %v296
    %v298 = vmul.f32 %v293, 1.442695
    %v299 = vpow.pop %v298
    %v300 = vmul.f32 %v294, 1.442695
    %v301 = vpow.pop %v300
    %v302 = vmul.f32 %v295, 1.442695
    %v303 = vpow.pop %v302
    %v304 = vadd.f32 %v297, 1.0
    %v305 = vadd.f32 %v299, 1.0
    %v306 = vadd.f32 %v301, 1.0
    %v307 = vadd.f32 %v303, 1.0
    %v308 = vrcp.pop %v304
    %v309 = vmul.f32 1.0, %v308
    %v310 = vrcp.pop %v305
    %v311 = vmul.f32 1.0, %v310
    %v312 = vrcp.pop %v306
    %v313 = vmul.f32 1.0, %v312
    %v314 = vrcp.pop %v307
    %v315 = vmul.f32 1.0, %v314
    %v316 = vxor.u32 %v280, 2147483648
    %v317 = vxor.u32 %v281, 2147483648
    %v318 = vxor.u32 %v282, 2147483648
    %v319 = vxor.u32 %v283, 2147483648
    %v320 = vmul.f32 %v316, 1.442695
    %v321 = vpow.pop %v320
    %v322 = vmul.f32 %v317, 1.442695
    %v323 = vpow.pop %v322
    %v324 = vmul.f32 %v318, 1.442695
    %v325 = vpow.pop %v324
    %v326 = vmul.f32 %v319, 1.442695
    %v327 = vpow.pop %v326
    %v328 = vadd.f32 %v321, 1.0
    %v329 = vadd.f32 %v323, 1.0
    %v330 = vadd.f32 %v325, 1.0
    %v331 = vadd.f32 %v327, 1.0
    %v332 = vrcp.pop %v328
    %v333 = vmul.f32 1.0, %v332
    %v334 = vrcp.pop %v329
    %v335 = vmul.f32 1.0, %v334
    %v336 = vrcp.pop %v330
    %v337 = vmul.f32 1.0, %v336
    %v338 = vrcp.pop %v331
    %v339 = vmul.f32 1.0, %v338
    %v340 = vtanh.pop %v284
    %v341 = vtanh.pop %v285
    %v342 = vtanh.pop %v286
    %v343 = vtanh.pop %v287
    %v344 = vxor.u32 %v288, 2147483648
    %v345 = vxor.u32 %v289, 2147483648
    %v346 = vxor.u32 %v290, 2147483648
    %v347 = vxor.u32 %v291, 2147483648
    %v348 = vmul.f32 %v344, 1.442695
    %v349 = vpow.pop %v348
    %v350 = vmul.f32 %v345, 1.442695
    %v351 = vpow.pop %v350
    %v352 = vmul.f32 %v346, 1.442695
    %v353 = vpow.pop %v352
    %v354 = vmul.f32 %v347, 1.442695
    %v355 = vpow.pop %v354
    %v356 = vadd.f32 %v349, 1.0
    %v357 = vadd.f32 %v351, 1.0
    %v358 = vadd.f32 %v353, 1.0
    %v359 = vadd.f32 %v355, 1.0
    %v360 = vrcp.pop %v356
    %v361 = vmul.f32 1.0, %v360
    %v362 = vrcp.pop %v357
    %v363 = vmul.f32 1.0, %v362
    %v364 = vrcp.pop %v358
    %v365 = vmul.f32 1.0, %v364
    %v366 = vrcp.pop %v359
    %v367 = vmul.f32 1.0, %v366
    %v368 = vmul.f32 %v333, %v76
    %v369 = vmul.f32 %v335, %v77
    %v370 = vmul.f32 %v337, %v78
    %v371 = vmul.f32 %v339, %v79
    %v372 = vmul.f32 %v309, %v340
    %v373 = vmul.f32 %v311, %v341
    %v374 = vmul.f32 %v313, %v342
    %v375 = vmul.f32 %v315, %v343
    %v376 = vadd.f32 %v368, %v372
    %v377 = vadd.f32 %v369, %v373
    %v378 = vadd.f32 %v370, %v374
    %v379 = vadd.f32 %v371, %v375
    %v380 = vtanh.pop %v376
    %v381 = vtanh.pop %v377
    %v382 = vtanh.pop %v378
    %v383 = vtanh.pop %v379
    %v384 = vmul.f32 %v361, %v380
    %v385 = vmul.f32 %v363, %v381
    %v386 = vmul.f32 %v365, %v382
    %v387 = vmul.f32 %v367, %v383
    %v388 = vstv %s71
    %vm389 = vcmp.lt.s32.totalorder %v388, %v70
    %v390 = vsel %vm389, %v384, %v72
    %v391 = vsel %vm389, %v385, %v73
    %v392 = vsel %vm389, %v386, %v74
    %v393 = vsel %vm389, %v387, %v75
    %v394 = vsel %vm389, %v376, %v76
    %v395 = vsel %vm389, %v377, %v77
    %v396 = vsel %vm389, %v378, %v78
    %v397 = vsel %vm389, %v379, %v79
    %s398 = sadd.s32 %s71, 1
    %s399 = scalar_lea.vmem [#allocation5], 64
    %v400 = vld [vmem:[%s399] sm:$0xf]
    %v401 = vld [vmem:[%s399 + $0x4] sm:$0xf]
    %v402 = vld [vmem:[%s399 + $0x8] sm:$0xf]
    %v403 = vld [vmem:[%s399 + $0xc] sm:$0xf]
    %v404 = vld [vmem:[%s399 + $0x10] sm:$0xf]
    %v405 = vld [vmem:[%s399 + $0x14] sm:$0xf]
    %v406 = vld [vmem:[%s399 + $0x18] sm:$0xf]
    %v407 = vld [vmem:[%s399 + $0x1c] sm:$0xf]
    %v408 = vld [vmem:[%s399 + $0x20] sm:$0xf]
    %v409 = vld [vmem:[%s399 + $0x24] sm:$0xf]
    %v410 = vld [vmem:[%s399 + $0x28] sm:$0xf]
    %v411 = vld [vmem:[%s399 + $0x2c] sm:$0xf]
    %v412 = vld [vmem:[%s399 + $0x30] sm:$0xf]
    %v413 = vld [vmem:[%s399 + $0x34] sm:$0xf]
    %v414 = vld [vmem:[%s399 + $0x38] sm:$0xf]
    %v415 = vld [vmem:[%s399 + $0x3c] sm:$0xf]
    %v416 = vunpack.c.l.bf16 %v400
    %v417 = vunpack.c.l.bf16 %v401
    %v418 = vunpack.c.l.bf16 %v402
    %v419 = vunpack.c.l.bf16 %v403
    %v420 = vunpack.c.l.bf16 %v404
    %v421 = vunpack.c.l.bf16 %v405
    %v422 = vunpack.c.l.bf16 %v406
    %v423 = vunpack.c.l.bf16 %v407
    %v424 = vunpack.c.l.bf16 %v408
    %v425 = vunpack.c.l.bf16 %v409
    %v426 = vunpack.c.l.bf16 %v410
    %v427 = vunpack.c.l.bf16 %v411
    %v428 = vunpack.c.l.bf16 %v412
    %v429 = vunpack.c.l.bf16 %v413
    %v430 = vunpack.c.l.bf16 %v414
    %v431 = vunpack.c.l.bf16 %v415
    %v432 = vpack.c.bf16 %v391, %v390
    %v433 = vpack.c.bf16 %v393, %v392
    %434 = vmatprep.subr.bf16.mxu0 0
    %435 = vmatpush1.bf16.msra.mxu0 %v432
    %436 = vmatprep.subr.bf16.mxu0 0
    %437 = vmatpush1.bf16.msra.mxu0 %v433
    %438 = vmatprep.subr.bf16.mxu0 0
    %439 = vmatpush1.bf16.msra.mxu0 0
    %440 = vmatprep.subr.bf16.mxu0 0
    %441 = vmatpush1.bf16.msra.mxu0 0
    %442 = vmatprep.subr.bf16.mxu0 0
    %443 = vmatpush1.bf16.msra.mxu0 0
    %444 = vmatprep.subr.bf16.mxu0 0
    %445 = vmatpush1.bf16.msra.mxu0 0
    %446 = vmatprep.subr.bf16.mxu0 0
    %447 = vmatpush1.bf16.msra.mxu0 0
    %448 = vmatprep.subr.bf16.mxu0 0
    %449 = vmatpush1.bf16.msra.mxu0 0
    %450 = vmatprep.subr.bf16.mxu0 0
    %451 = vmatpush1.bf16.msra.mxu0 0
    %452 = vmatprep.subr.bf16.mxu0 0
    %453 = vmatpush1.bf16.msra.mxu0 0
    %454 = vmatprep.subr.bf16.mxu0 0
    %455 = vmatpush1.bf16.msra.mxu0 0
    %456 = vmatprep.subr.bf16.mxu0 0
    %457 = vmatpush1.bf16.msra.mxu0 0
    %458 = vmatprep.subr.bf16.mxu0 0
    %459 = vmatpush1.bf16.msra.mxu0 0
    %460 = vmatprep.subr.bf16.mxu0 0
    %461 = vmatpush1.bf16.msra.mxu0 0
    %462 = vmatprep.subr.bf16.mxu0 0
    %463 = vmatpush1.bf16.msra.mxu0 0
    %464 = vmatprep.subr.bf16.mxu0 0
    %465 = vmatpush1.bf16.msra.mxu0 0
    %466 = vmatprep.mubr.bf16.mxu0 0
    %467 = vmatmul.mubr.bf16.gmra.mrb[0].mxu0 %v156
    %v468 = vpop.f32.mrb[0].mxu0
    %v469 = vadd.f32 0.0, %v468
    %v470 = vpop.f32.mrb[0].mxu0
    %v471 = vpop.f32.mrb[0].mxu0
    %v472 = vadd.f32 0.0, %v471
    %v473 = vpop.f32.mrb[0].mxu0
    %474 = vmatprep.mubr.bf16.mxu0 0
    %475 = vmatmul.mubr.bf16.gmra.mrb[0].mxu0 %v159
    %v476 = vpop.f32.mrb[0].mxu0
    %v477 = vadd.f32 0.0, %v476
    %v478 = vpop.f32.mrb[0].mxu0
    %v479 = vpop.f32.mrb[0].mxu0
    %v480 = vadd.f32 0.0, %v479
    %v481 = vpop.f32.mrb[0].mxu0
    %482 = vmatprep.mubr.bf16.mxu0 0
    %483 = vmatmul.mubr.bf16.gmra.mrb[0].mxu0 %v162
    %v484 = vpop.f32.mrb[0].mxu0
    %v485 = vadd.f32 0.0, %v484
    %v486 = vpop.f32.mrb[0].mxu0
    %v487 = vpop.f32.mrb[0].mxu0
    %v488 = vadd.f32 0.0, %v487
    %v489 = vpop.f32.mrb[0].mxu0
    %490 = vmatprep.mubr.bf16.mxu0 0
    %491 = vmatmul.mubr.bf16.gmra.mrb[0].mxu0 %v165
    %v492 = vpop.f32.mrb[0].mxu0
    %v493 = vadd.f32 0.0, %v492
    %v494 = vpop.f32.mrb[0].mxu0
    %v495 = vpop.f32.mrb[0].mxu0
    %v496 = vadd.f32 0.0, %v495
    %v497 = vpop.f32.mrb[0].mxu0
    %498 = vmatprep.mubr.bf16.mxu0 0
    %499 = vmatmul.mubr.bf16.gmra.mrb[0].mxu0 %v168
    %v500 = vpop.f32.mrb[0].mxu0
    %v501 = vadd.f32 0.0, %v500
    %v502 = vpop.f32.mrb[0].mxu0
    %v503 = vpop.f32.mrb[0].mxu0
    %v504 = vadd.f32 0.0, %v503
    %v505 = vpop.f32.mrb[0].mxu0
    %506 = vmatprep.mubr.bf16.mxu0 0
    %507 = vmatmul.mubr.bf16.gmra.mrb[0].mxu0 %v171
    %v508 = vpop.f32.mrb[0].mxu0
    %v509 = vadd.f32 0.0, %v508
    %v510 = vpop.f32.mrb[0].mxu0
    %v511 = vpop.f32.mrb[0].mxu0
    %v512 = vadd.f32 0.0, %v511
    %v513 = vpop.f32.mrb[0].mxu0
    %514 = vmatprep.mubr.bf16.mxu0 0
    %515 = vmatmul.mubr.bf16.gmra.mrb[0].mxu0 %v174
    %v516 = vpop.f32.mrb[0].mxu0
    %v517 = vadd.f32 0.0, %v516
    %v518 = vpop.f32.mrb[0].mxu0
    %v519 = vpop.f32.mrb[0].mxu0
    %v520 = vadd.f32 0.0, %v519
    %v521 = vpop.f32.mrb[0].mxu0
    %522 = vmatprep.mubr.bf16.mxu0 0
    %523 = vmatmul.mubr.bf16.gmra.mrb[0].mxu0 %v177
    %v524 = vpop.f32.mrb[0].mxu0
    %v525 = vadd.f32 0.0, %v524
    %v526 = vpop.f32.mrb[0].mxu0
    %v527 = vpop.f32.mrb[0].mxu0
    %v528 = vadd.f32 0.0, %v527
    %v529 = vpop.f32.mrb[0].mxu0
    %530 = vdwg.mxu0
    %v531 = vadd.f32 %v416, %v469
    %v532 = vadd.f32 %v417, %v472
    %v533 = vadd.f32 %v418, %v477
    %v534 = vadd.f32 %v419, %v480
    %v535 = vadd.f32 %v420, %v485
    %v536 = vadd.f32 %v421, %v488
    %v537 = vadd.f32 %v422, %v493
    %v538 = vadd.f32 %v423, %v496
    %v539 = vadd.f32 %v424, %v501
    %v540 = vadd.f32 %v425, %v504
    %v541 = vadd.f32 %v426, %v509
    %v542 = vadd.f32 %v427, %v512
    %v543 = vadd.f32 %v428, %v517
    %v544 = vadd.f32 %v429, %v520
    %v545 = vadd.f32 %v430, %v525
    %v546 = vadd.f32 %v431, %v528
    %v547 = vxor.u32 %v531, 2147483648
    %v548 = vxor.u32 %v532, 2147483648
    %v549 = vxor.u32 %v533, 2147483648
    %v550 = vxor.u32 %v534, 2147483648
    %v551 = vmul.f32 %v547, 1.442695
    %v552 = vpow.pop %v551
    %v553 = vmul.f32 %v548, 1.442695
    %v554 = vpow.pop %v553
    %v555 = vmul.f32 %v549, 1.442695
    %v556 = vpow.pop %v555
    %v557 = vmul.f32 %v550, 1.442695
    %v558 = vpow.pop %v557
    %v559 = vadd.f32 %v552, 1.0
    %v560 = vadd.f32 %v554, 1.0
    %v561 = vadd.f32 %v556, 1.0
    %v562 = vadd.f32 %v558, 1.0
    %v563 = vrcp.pop %v559
    %v564 = vmul.f32 1.0, %v563
    %v565 = vrcp.pop %v560
    %v566 = vmul.f32 1.0, %v565
    %v567 = vrcp.pop %v561
    %v568 = vmul.f32 1.0, %v567
    %v569 = vrcp.pop %v562
    %v570 = vmul.f32 1.0, %v569
    %v571 = vxor.u32 %v535, 2147483648
    %v572 = vxor.u32 %v536, 2147483648
    %v573 = vxor.u32 %v537, 2147483648
    %v574 = vxor.u32 %v538, 2147483648
    %v575 = vmul.f32 %v571, 1.442695
    %v576 = vpow.pop %v575
    %v577 = vmul.f32 %v572, 1.442695
    %v578 = vpow.pop %v577
    %v579 = vmul.f32 %v573, 1.442695
    %v580 = vpow.pop %v579
    %v581 = vmul.f32 %v574, 1.442695
    %v582 = vpow.pop %v581
    %v583 = vadd.f32 %v576, 1.0
    %v584 = vadd.f32 %v578, 1.0
    %v585 = vadd.f32 %v580, 1.0
    %v586 = vadd.f32 %v582, 1.0
    %v587 = vrcp.pop %v583
    %v588 = vmul.f32 1.0, %v587
    %v589 = vrcp.pop %v584
    %v590 = vmul.f32 1.0, %v589
    %v591 = vrcp.pop %v585
    %v592 = vmul.f32 1.0, %v591
    %v593 = vrcp.pop %v586
    %v594 = vmul.f32 1.0, %v593
    %v595 = vtanh.pop %v539
    %v596 = vtanh.pop %v540
    %v597 = vtanh.pop %v541
    %v598 = vtanh.pop %v542
    %v599 = vxor.u32 %v543, 2147483648
    %v600 = vxor.u32 %v544, 2147483648
    %v601 = vxor.u32 %v545, 2147483648
    %v602 = vxor.u32 %v546, 2147483648
    %v603 = vmul.f32 %v599, 1.442695
    %v604 = vpow.pop %v603
    %v605 = vmul.f32 %v600, 1.442695
    %v606 = vpow.pop %v605
    %v607 = vmul.f32 %v601, 1.442695
    %v608 = vpow.pop %v607
    %v609 = vmul.f32 %v602, 1.442695
    %v610 = vpow.pop %v609
    %v611 = vadd.f32 %v604, 1.0
    %v612 = vadd.f32 %v606, 1.0
    %v613 = vadd.f32 %v608, 1.0
    %v614 = vadd.f32 %v610, 1.0
    %v615 = vrcp.pop %v611
    %v616 = vmul.f32 1.0, %v615
    %v617 = vrcp.pop %v612
    %v618 = vmul.f32 1.0, %v617
    %v619 = vrcp.pop %v613
    %v620 = vmul.f32 1.0, %v619
    %v621 = vrcp.pop %v614
    %v622 = vmul.f32 1.0, %v621
    %v623 = vmul.f32 %v588, %v394
    %v624 = vmul.f32 %v590, %v395
    %v625 = vmul.f32 %v592, %v396
    %v626 = vmul.f32 %v594, %v397
    %v627 = vmul.f32 %v564, %v595
    %v628 = vmul.f32 %v566, %v596
    %v629 = vmul.f32 %v568, %v597
    %v630 = vmul.f32 %v570, %v598
    %v631 = vadd.f32 %v623, %v627
    %v632 = vadd.f32 %v624, %v628
    %v633 = vadd.f32 %v625, %v629
    %v634 = vadd.f32 %v626, %v630
    %v635 = vtanh.pop %v631
    %v636 = vtanh.pop %v632
    %v637 = vtanh.pop %v633
    %v638 = vtanh.pop %v634
    %v639 = vmul.f32 %v616, %v635
    %v640 = vmul.f32 %v618, %v636
    %v641 = vmul.f32 %v620, %v637
    %v642 = vmul.f32 %v622, %v638
    %v643 = vstv %s398
    %vm644 = vcmp.lt.s32.totalorder %v643, %v70
    %v645 = vsel %vm644, %v639, %v390
    %v646 = vsel %vm644, %v640, %v391
    %v647 = vsel %vm644, %v641, %v392
    %v648 = vsel %vm644, %v642, %v393
    %v649 = vsel %vm644, %v631, %v394
    %v650 = vsel %vm644, %v632, %v395
    %v651 = vsel %vm644, %v633, %v396
    %v652 = vsel %vm644, %v634, %v397
    %s653 = sadd.s32 %s71, 2
    %s654 = scalar_lea.vmem [#allocation5], 128
    %v655 = vld [vmem:[%s654] sm:$0xf]
    %v656 = vld [vmem:[%s654 + $0x4] sm:$0xf]
    %v657 = vld [vmem:[%s654 + $0x8] sm:$0xf]
    %v658 = vld [vmem:[%s654 + $0xc] sm:$0xf]
    %v659 = vld [vmem:[%s654 + $0x10] sm:$0xf]
    %v660 = vld [vmem:[%s654 + $0x14] sm:$0xf]
    %v661 = vld [vmem:[%s654 + $0x18] sm:$0xf]
    %v662 = vld [vmem:[%s654 + $0x1c] sm:$0xf]
    %v663 = vld [vmem:[%s654 + $0x20] sm:$0xf]
    %v664 = vld [vmem:[%s654 + $0x24] sm:$0xf]
    %v665 = vld [vmem:[%s654 + $0x28] sm:$0xf]
    %v666 = vld [vmem:[%s654 + $0x2c] sm:$0xf]
    %v667 = vld [vmem:[%s654 + $0x30] sm:$0xf]
    %v668 = vld [vmem:[%s654 + $0x34] sm:$0xf]
    %v669 = vld [vmem:[%s654 + $0x38] sm:$0xf]
    %v670 = vld [vmem:[%s654 + $0x3c] sm:$0xf]
    %v671 = vunpack.c.l.bf16 %v655
    %v672 = vunpack.c.l.bf16 %v656
    %v673 = vunpack.c.l.bf16 %v657
    %v674 = vunpack.c.l.bf16 %v658
    %v675 = vunpack.c.l.bf16 %v659
    %v676 = vunpack.c.l.bf16 %v660
    %v677 = vunpack.c.l.bf16 %v661
    %v678 = vunpack.c.l.bf16 %v662
    %v679 = vunpack.c.l.bf16 %v663
    %v680 = vunpack.c.l.bf16 %v664
    %v681 = vunpack.c.l.bf16 %v665
    %v682 = vunpack.c.l.bf16 %v666
    %v683 = vunpack.c.l.bf16 %v667
    %v684 = vunpack.c.l.bf16 %v668
    %v685 = vunpack.c.l.bf16 %v669
    %v686 = vunpack.c.l.bf16 %v670
    %v687 = vpack.c.bf16 %v646, %v645
    %v688 = vpack.c.bf16 %v648, %v647
    %689 = vmatprep.subr.bf16.mxu0 0
    %690 = vmatpush1.bf16.msra.mxu0 %v687
    %691 = vmatprep.subr.bf16.mxu0 0
    %692 = vmatpush1.bf16.msra.mxu0 %v688
    %693 = vmatprep.subr.bf16.mxu0 0
    %694 = vmatpush1.bf16.msra.mxu0 0
    %695 = vmatprep.subr.bf16.mxu0 0
    %696 = vmatpush1.bf16.msra.mxu0 0
    %697 = vmatprep.subr.bf16.mxu0 0
    %698 = vmatpush1.bf16.msra.mxu0 0
    %699 = vmatprep.subr.bf16.mxu0 0
    %700 = vmatpush1.bf16.msra.mxu0 0
    %701 = vmatprep.subr.bf16.mxu0 0
    %702 = vmatpush1.bf16.msra.mxu0 0
    %703 = vmatprep.subr.bf16.mxu0 0
    %704 = vmatpush1.bf16.msra.mxu0 0
    %705 = vmatprep.subr.bf16.mxu0 0
    %706 = vmatpush1.bf16.msra.mxu0 0
    %707 = vmatprep.subr.bf16.mxu0 0
    %708 = vmatpush1.bf16.msra.mxu0 0
    %709 = vmatprep.subr.bf16.mxu0 0
    %710 = vmatpush1.bf16.msra.mxu0 0
    %711 = vmatprep.subr.bf16.mxu0 0
    %712 = vmatpush1.bf16.msra.mxu0 0
    %713 = vmatprep.subr.bf16.mxu0 0
    %714 = vmatpush1.bf16.msra.mxu0 0
    %715 = vmatprep.subr.bf16.mxu0 0
    %716 = vmatpush1.bf16.msra.mxu0 0
    %717 = vmatprep.subr.bf16.mxu0 0
    %718 = vmatpush1.bf16.msra.mxu0 0
    %719 = vmatprep.subr.bf16.mxu0 0
    %720 = vmatpush1.bf16.msra.mxu0 0
    %721 = vmatprep.mubr.bf16.mxu0 0
    %722 = vmatmul.mubr.bf16.gmra.mrb[0].mxu0 %v156
    %v723 = vpop.f32.mrb[0].mxu0
    %v724 = vadd.f32 0.0, %v723
    %v725 = vpop.f32.mrb[0].mxu0
    %v726 = vpop.f32.mrb[0].mxu0
    %v727 = vadd.f32 0.0, %v726
    %v728 = vpop.f32.mrb[0].mxu0
    %729 = vmatprep.mubr.bf16.mxu0 0
    %730 = vmatmul.mubr.bf16.gmra.mrb[0].mxu0 %v159
    %v731 = vpop.f32.mrb[0].mxu0
    %v732 = vadd.f32 0.0, %v731
    %v733 = vpop.f32.mrb[0].mxu0
    %v734 = vpop.f32.mrb[0].mxu0
    %v735 = vadd.f32 0.0, %v734
    %v736 = vpop.f32.mrb[0].mxu0
    %737 = vmatprep.mubr.bf16.mxu0 0
    %738 = vmatmul.mubr.bf16.gmra.mrb[0].mxu0 %v162
    %v739 = vpop.f32.mrb[0].mxu0
    %v740 = vadd.f32 0.0, %v739
    %v741 = vpop.f32.mrb[0].mxu0
    %v742 = vpop.f32.mrb[0].mxu0
    %v743 = vadd.f32 0.0, %v742
    %v744 = vpop.f32.mrb[0].mxu0
    %745 = vmatprep.mubr.bf16.mxu0 0
    %746 = vmatmul.mubr.bf16.gmra.mrb[0].mxu0 %v165
    %v747 = vpop.f32.mrb[0].mxu0
    %v748 = vadd.f32 0.0, %v747
    %v749 = vpop.f32.mrb[0].mxu0
    %v750 = vpop.f32.mrb[0].mxu0
    %v751 = vadd.f32 0.0, %v750
    %v752 = vpop.f32.mrb[0].mxu0
    %753 = vmatprep.mubr.bf16.mxu0 0
    %754 = vmatmul.mubr.bf16.gmra.mrb[0].mxu0 %v168
    %v755 = vpop.f32.mrb[0].mxu0
    %v756 = vadd.f32 0.0, %v755
    %v757 = vpop.f32.mrb[0].mxu0
    %v758 = vpop.f32.mrb[0].mxu0
    %v759 = vadd.f32 0.0, %v758
    %v760 = vpop.f32.mrb[0].mxu0
    %761 = vmatprep.mubr.bf16.mxu0 0
    %762 = vmatmul.mubr.bf16.gmra.mrb[0].mxu0 %v171
    %v763 = vpop.f32.mrb[0].mxu0
    %v764 = vadd.f32 0.0, %v763
    %v765 = vpop.f32.mrb[0].mxu0
    %v766 = vpop.f32.mrb[0].mxu0
    %v767 = vadd.f32 0.0, %v766
    %v768 = vpop.f32.mrb[0].mxu0
    %769 = vmatprep.mubr.bf16.mxu0 0
    %770 = vmatmul.mubr.bf16.gmra.mrb[0].mxu0 %v174
    %v771 = vpop.f32.mrb[0].mxu0
    %v772 = vadd.f32 0.0, %v771
    %v773 = vpop.f32.mrb[0].mxu0
    %v774 = vpop.f32.mrb[0].mxu0
    %v775 = vadd.f32 0.0, %v774
    %v776 = vpop.f32.mrb[0].mxu0
    %777 = vmatprep.mubr.bf16.mxu0 0
    %778 = vmatmul.mubr.bf16.gmra.mrb[0].mxu0 %v177
    %v779 = vpop.f32.mrb[0].mxu0
    %v780 = vadd.f32 0.0, %v779
    %v781 = vpop.f32.mrb[0].mxu0
    %v782 = vpop.f32.mrb[0].mxu0
    %v783 = vadd.f32 0.0, %v782
    %v784 = vpop.f32.mrb[0].mxu0
    %785 = vdwg.mxu0
    %v786 = vadd.f32 %v671, %v724
    %v787 = vadd.f32 %v672, %v727
    %v788 = vadd.f32 %v673, %v732
    %v789 = vadd.f32 %v674, %v735
    %v790 = vadd.f32 %v675, %v740
    %v791 = vadd.f32 %v676, %v743
    %v792 = vadd.f32 %v677, %v748
    %v793 = vadd.f32 %v678, %v751
    %v794 = vadd.f32 %v679, %v756
    %v795 = vadd.f32 %v680, %v759
    %v796 = vadd.f32 %v681, %v764
    %v797 = vadd.f32 %v682, %v767
    %v798 = vadd.f32 %v683, %v772
    %v799 = vadd.f32 %v684, %v775
    %v800 = vadd.f32 %v685, %v780
    %v801 = vadd.f32 %v686, %v783
    %v802 = vxor.u32 %v786, 2147483648
    %v803 = vxor.u32 %v787, 2147483648
    %v804 = vxor.u32 %v788, 2147483648
    %v805 = vxor.u32 %v789, 2147483648
    %v806 = vmul.f32 %v802, 1.442695
    %v807 = vpow.pop %v806
    %v808 = vmul.f32 %v803, 1.442695
    %v809 = vpow.pop %v808
    %v810 = vmul.f32 %v804, 1.442695
    %v811 = vpow.pop %v810
    %v812 = vmul.f32 %v805, 1.442695
    %v813 = vpow.pop %v812
    %v814 = vadd.f32 %v807, 1.0
    %v815 = vadd.f32 %v809, 1.0
    %v816 = vadd.f32 %v811, 1.0
    %v817 = vadd.f32 %v813, 1.0
    %v818 = vrcp.pop %v814
    %v819 = vmul.f32 1.0, %v818
    %v820 = vrcp.pop %v815
    %v821 = vmul.f32 1.0, %v820
    %v822 = vrcp.pop %v816
    %v823 = vmul.f32 1.0, %v822
    %v824 = vrcp.pop %v817
    %v825 = vmul.f32 1.0, %v824
    %v826 = vxor.u32 %v790, 2147483648
    %v827 = vxor.u32 %v791, 2147483648
    %v828 = vxor.u32 %v792, 2147483648
    %v829 = vxor.u32 %v793, 2147483648
    %v830 = vmul.f32 %v826, 1.442695
    %v831 = vpow.pop %v830
    %v832 = vmul.f32 %v827, 1.442695
    %v833 = vpow.pop %v832
    %v834 = vmul.f32 %v828, 1.442695
    %v835 = vpow.pop %v834
    %v836 = vmul.f32 %v829, 1.442695
    %v837 = vpow.pop %v836
    %v838 = vadd.f32 %v831, 1.0
    %v839 = vadd.f32 %v833, 1.0
    %v840 = vadd.f32 %v835, 1.0
    %v841 = vadd.f32 %v837, 1.0
    %v842 = vrcp.pop %v838
    %v843 = vmul.f32 1.0, %v842
    %v844 = vrcp.pop %v839
    %v845 = vmul.f32 1.0, %v844
    %v846 = vrcp.pop %v840
    %v847 = vmul.f32 1.0, %v846
    %v848 = vrcp.pop %v841
    %v849 = vmul.f32 1.0, %v848
    %v850 = vtanh.pop %v794
    %v851 = vtanh.pop %v795
    %v852 = vtanh.pop %v796
    %v853 = vtanh.pop %v797
    %v854 = vxor.u32 %v798, 2147483648
    %v855 = vxor.u32 %v799, 2147483648
    %v856 = vxor.u32 %v800, 2147483648
    %v857 = vxor.u32 %v801, 2147483648
    %v858 = vmul.f32 %v854, 1.442695
    %v859 = vpow.pop %v858
    %v860 = vmul.f32 %v855, 1.442695
    %v861 = vpow.pop %v860
    %v862 = vmul.f32 %v856, 1.442695
    %v863 = vpow.pop %v862
    %v864 = vmul.f32 %v857, 1.442695
    %v865 = vpow.pop %v864
    %v866 = vadd.f32 %v859, 1.0
    %v867 = vadd.f32 %v861, 1.0
    %v868 = vadd.f32 %v863, 1.0
    %v869 = vadd.f32 %v865, 1.0
    %v870 = vrcp.pop %v866
    %v871 = vmul.f32 1.0, %v870
    %v872 = vrcp.pop %v867
    %v873 = vmul.f32 1.0, %v872
    %v874 = vrcp.pop %v868
    %v875 = vmul.f32 1.0, %v874
    %v876 = vrcp.pop %v869
    %v877 = vmul.f32 1.0, %v876
    %v878 = vmul.f32 %v843, %v649
    %v879 = vmul.f32 %v845, %v650
    %v880 = vmul.f32 %v847, %v651
    %v881 = vmul.f32 %v849, %v652
    %v882 = vmul.f32 %v819, %v850
    %v883 = vmul.f32 %v821, %v851
    %v884 = vmul.f32 %v823, %v852
    %v885 = vmul.f32 %v825, %v853
    %v886 = vadd.f32 %v878, %v882
    %v887 = vadd.f32 %v879, %v883
    %v888 = vadd.f32 %v880, %v884
    %v889 = vadd.f32 %v881, %v885
    %v890 = vtanh.pop %v886
    %v891 = vtanh.pop %v887
    %v892 = vtanh.pop %v888
    %v893 = vtanh.pop %v889
    %v894 = vmul.f32 %v871, %v890
    %v895 = vmul.f32 %v873, %v891
    %v896 = vmul.f32 %v875, %v892
    %v897 = vmul.f32 %v877, %v893
    %v898 = vstv %s653
    %vm899 = vcmp.lt.s32.totalorder %v898, %v70
    %v900 = vsel %vm899, %v894, %v645
    %v901 = vsel %vm899, %v895, %v646
    %v902 = vsel %vm899, %v896, %v647
    %v903 = vsel %vm899, %v897, %v648
    %v904 = vsel %vm899, %v886, %v649
    %v905 = vsel %vm899, %v887, %v650
    %v906 = vsel %vm899, %v888, %v651
    %v907 = vsel %vm899, %v889, %v652
    %s908 = sadd.s32 %s71, 3
    %s909 = scalar_lea.vmem [#allocation5], 192
    %v910 = vld [vmem:[%s909] sm:$0xf]
    %v911 = vld [vmem:[%s909 + $0x4] sm:$0xf]
    %v912 = vld [vmem:[%s909 + $0x8] sm:$0xf]
    %v913 = vld [vmem:[%s909 + $0xc] sm:$0xf]
    %v914 = vld [vmem:[%s909 + $0x10] sm:$0xf]
    %v915 = vld [vmem:[%s909 + $0x14] sm:$0xf]
    %v916 = vld [vmem:[%s909 + $0x18] sm:$0xf]
    %v917 = vld [vmem:[%s909 + $0x1c] sm:$0xf]
    %v918 = vld [vmem:[%s909 + $0x20] sm:$0xf]
    %v919 = vld [vmem:[%s909 + $0x24] sm:$0xf]
    %v920 = vld [vmem:[%s909 + $0x28] sm:$0xf]
    %v921 = vld [vmem:[%s909 + $0x2c] sm:$0xf]
    %v922 = vld [vmem:[%s909 + $0x30] sm:$0xf]
    %v923 = vld [vmem:[%s909 + $0x34] sm:$0xf]
    %v924 = vld [vmem:[%s909 + $0x38] sm:$0xf]
    %v925 = vld [vmem:[%s909 + $0x3c] sm:$0xf]
    %v926 = vunpack.c.l.bf16 %v910
    %v927 = vunpack.c.l.bf16 %v911
    %v928 = vunpack.c.l.bf16 %v912
    %v929 = vunpack.c.l.bf16 %v913
    %v930 = vunpack.c.l.bf16 %v914
    %v931 = vunpack.c.l.bf16 %v915
    %v932 = vunpack.c.l.bf16 %v916
    %v933 = vunpack.c.l.bf16 %v917
    %v934 = vunpack.c.l.bf16 %v918
    %v935 = vunpack.c.l.bf16 %v919
    %v936 = vunpack.c.l.bf16 %v920
    %v937 = vunpack.c.l.bf16 %v921
    %v938 = vunpack.c.l.bf16 %v922
    %v939 = vunpack.c.l.bf16 %v923
    %v940 = vunpack.c.l.bf16 %v924
    %v941 = vunpack.c.l.bf16 %v925
    %v942 = vpack.c.bf16 %v901, %v900
    %v943 = vpack.c.bf16 %v903, %v902
    %944 = vmatprep.subr.bf16.mxu0 0
    %945 = vmatpush1.bf16.msra.mxu0 %v942
    %946 = vmatprep.subr.bf16.mxu0 0
    %947 = vmatpush1.bf16.msra.mxu0 %v943
    %948 = vmatprep.subr.bf16.mxu0 0
    %949 = vmatpush1.bf16.msra.mxu0 0
    %950 = vmatprep.subr.bf16.mxu0 0
    %951 = vmatpush1.bf16.msra.mxu0 0
    %952 = vmatprep.subr.bf16.mxu0 0
    %953 = vmatpush1.bf16.msra.mxu0 0
    %954 = vmatprep.subr.bf16.mxu0 0
    %955 = vmatpush1.bf16.msra.mxu0 0
    %956 = vmatprep.subr.bf16.mxu0 0
    %957 = vmatpush1.bf16.msra.mxu0 0
    %958 = vmatprep.subr.bf16.mxu0 0
    %959 = vmatpush1.bf16.msra.mxu0 0
    %960 = vmatprep.subr.bf16.mxu0 0
    %961 = vmatpush1.bf16.msra.mxu0 0
    %962 = vmatprep.subr.bf16.mxu0 0
    %963 = vmatpush1.bf16.msra.mxu0 0
    %964 = vmatprep.subr.bf16.mxu0 0
    %965 = vmatpush1.bf16.msra.mxu0 0
    %966 = vmatprep.subr.bf16.mxu0 0
    %967 = vmatpush1.bf16.msra.mxu0 0
    %968 = vmatprep.subr.bf16.mxu0 0
    %969 = vmatpush1.bf16.msra.mxu0 0
    %970 = vmatprep.subr.bf16.mxu0 0
    %971 = vmatpush1.bf16.msra.mxu0 0
    %972 = vmatprep.subr.bf16.mxu0 0
    %973 = vmatpush1.bf16.msra.mxu0 0
    %974 = vmatprep.subr.bf16.mxu0 0
    %975 = vmatpush1.bf16.msra.mxu0 0
    %976 = vmatprep.mubr.bf16.mxu0 0
    %977 = vmatmul.mubr.bf16.gmra.mrb[0].mxu0 %v156
    %v978 = vpop.f32.mrb[0].mxu0
    %v979 = vadd.f32 0.0, %v978
    %v980 = vpop.f32.mrb[0].mxu0
    %v981 = vpop.f32.mrb[0].mxu0
    %v982 = vadd.f32 0.0, %v981
    %v983 = vpop.f32.mrb[0].mxu0
    %984 = vmatprep.mubr.bf16.mxu0 0
    %985 = vmatmul.mubr.bf16.gmra.mrb[0].mxu0 %v159
    %v986 = vpop.f32.mrb[0].mxu0
    %v987 = vadd.f32 0.0, %v986
    %v988 = vpop.f32.mrb[0].mxu0
    %v989 = vpop.f32.mrb[0].mxu0
    %v990 = vadd.f32 0.0, %v989
    %v991 = vpop.f32.mrb[0].mxu0
    %992 = vmatprep.mubr.bf16.mxu0 0
    %993 = vmatmul.mubr.bf16.gmra.mrb[0].mxu0 %v162
    %v994 = vpop.f32.mrb[0].mxu0
    %v995 = vadd.f32 0.0, %v994
    %v996 = vpop.f32.mrb[0].mxu0
    %v997 = vpop.f32.mrb[0].mxu0
    %v998 = vadd.f32 0.0, %v997
    %v999 = vpop.f32.mrb[0].mxu0
    %1000 = vmatprep.mubr.bf16.mxu0 0
    %1001 = vmatmul.mubr.bf16.gmra.mrb[0].mxu0 %v165
    %v1002 = vpop.f32.mrb[0].mxu0
    %v1003 = vadd.f32 0.0, %v1002
    %v1004 = vpop.f32.mrb[0].mxu0
    %v1005 = vpop.f32.mrb[0].mxu0
    %v1006 = vadd.f32 0.0, %v1005
    %v1007 = vpop.f32.mrb[0].mxu0
    %1008 = vmatprep.mubr.bf16.mxu0 0
    %1009 = vmatmul.mubr.bf16.gmra.mrb[0].mxu0 %v168
    %v1010 = vpop.f32.mrb[0].mxu0
    %v1011 = vadd.f32 0.0, %v1010
    %v1012 = vpop.f32.mrb[0].mxu0
    %v1013 = vpop.f32.mrb[0].mxu0
    %v1014 = vadd.f32 0.0, %v1013
    %v1015 = vpop.f32.mrb[0].mxu0
    %1016 = vmatprep.mubr.bf16.mxu0 0
    %1017 = vmatmul.mubr.bf16.gmra.mrb[0].mxu0 %v171
    %v1018 = vpop.f32.mrb[0].mxu0
    %v1019 = vadd.f32 0.0, %v1018
    %v1020 = vpop.f32.mrb[0].mxu0
    %v1021 = vpop.f32.mrb[0].mxu0
    %v1022 = vadd.f32 0.0, %v1021
    %v1023 = vpop.f32.mrb[0].mxu0
    %1024 = vmatprep.mubr.bf16.mxu0 0
    %1025 = vmatmul.mubr.bf16.gmra.mrb[0].mxu0 %v174
    %v1026 = vpop.f32.mrb[0].mxu0
    %v1027 = vadd.f32 0.0, %v1026
    %v1028 = vpop.f32.mrb[0].mxu0
    %v1029 = vpop.f32.mrb[0].mxu0
    %v1030 = vadd.f32 0.0, %v1029
    %v1031 = vpop.f32.mrb[0].mxu0
    %1032 = vmatprep.mubr.bf16.mxu0 0
    %1033 = vmatmul.mubr.bf16.gmra.mrb[0].mxu0 %v177
    %v1034 = vpop.f32.mrb[0].mxu0
    %v1035 = vadd.f32 0.0, %v1034
    %v1036 = vpop.f32.mrb[0].mxu0
    %v1037 = vpop.f32.mrb[0].mxu0
    %v1038 = vadd.f32 0.0, %v1037
    %v1039 = vpop.f32.mrb[0].mxu0
    %1040 = vdwg.mxu0
    %v1041 = vadd.f32 %v926, %v979
    %v1042 = vadd.f32 %v927, %v982
    %v1043 = vadd.f32 %v928, %v987
    %v1044 = vadd.f32 %v929, %v990
    %v1045 = vadd.f32 %v930, %v995
    %v1046 = vadd.f32 %v931, %v998
    %v1047 = vadd.f32 %v932, %v1003
    %v1048 = vadd.f32 %v933, %v1006
    %v1049 = vadd.f32 %v934, %v1011
    %v1050 = vadd.f32 %v935, %v1014
    %v1051 = vadd.f32 %v936, %v1019
    %v1052 = vadd.f32 %v937, %v1022
    %v1053 = vadd.f32 %v938, %v1027
    %v1054 = vadd.f32 %v939, %v1030
    %v1055 = vadd.f32 %v940, %v1035
    %v1056 = vadd.f32 %v941, %v1038
    %v1057 = vxor.u32 %v1041, 2147483648
    %v1058 = vxor.u32 %v1042, 2147483648
    %v1059 = vxor.u32 %v1043, 2147483648
    %v1060 = vxor.u32 %v1044, 2147483648
    %v1061 = vmul.f32 %v1057, 1.442695
    %v1062 = vpow.pop %v1061
    %v1063 = vmul.f32 %v1058, 1.442695
    %v1064 = vpow.pop %v1063
    %v1065 = vmul.f32 %v1059, 1.442695
    %v1066 = vpow.pop %v1065
    %v1067 = vmul.f32 %v1060, 1.442695
    %v1068 = vpow.pop %v1067
    %v1069 = vadd.f32 %v1062, 1.0
    %v1070 = vadd.f32 %v1064, 1.0
    %v1071 = vadd.f32 %v1066, 1.0
    %v1072 = vadd.f32 %v1068, 1.0
    %v1073 = vrcp.pop %v1069
    %v1074 = vmul.f32 1.0, %v1073
    %v1075 = vrcp.pop %v1070
    %v1076 = vmul.f32 1.0, %v1075
    %v1077 = vrcp.pop %v1071
    %v1078 = vmul.f32 1.0, %v1077
    %v1079 = vrcp.pop %v1072
    %v1080 = vmul.f32 1.0, %v1079
    %v1081 = vxor.u32 %v1045, 2147483648
    %v1082 = vxor.u32 %v1046, 2147483648
    %v1083 = vxor.u32 %v1047, 2147483648
    %v1084 = vxor.u32 %v1048, 2147483648
    %v1085 = vmul.f32 %v1081, 1.442695
    %v1086 = vpow.pop %v1085
    %v1087 = vmul.f32 %v1082, 1.442695
    %v1088 = vpow.pop %v1087
    %v1089 = vmul.f32 %v1083, 1.442695
    %v1090 = vpow.pop %v1089
    %v1091 = vmul.f32 %v1084, 1.442695
    %v1092 = vpow.pop %v1091
    %v1093 = vadd.f32 %v1086, 1.0
    %v1094 = vadd.f32 %v1088, 1.0
    %v1095 = vadd.f32 %v1090, 1.0
    %v1096 = vadd.f32 %v1092, 1.0
    %v1097 = vrcp.pop %v1093
    %v1098 = vmul.f32 1.0, %v1097
    %v1099 = vrcp.pop %v1094
    %v1100 = vmul.f32 1.0, %v1099
    %v1101 = vrcp.pop %v1095
    %v1102 = vmul.f32 1.0, %v1101
    %v1103 = vrcp.pop %v1096
    %v1104 = vmul.f32 1.0, %v1103
    %v1105 = vtanh.pop %v1049
    %v1106 = vtanh.pop %v1050
    %v1107 = vtanh.pop %v1051
    %v1108 = vtanh.pop %v1052
    %v1109 = vxor.u32 %v1053, 2147483648
    %v1110 = vxor.u32 %v1054, 2147483648
    %v1111 = vxor.u32 %v1055, 2147483648
    %v1112 = vxor.u32 %v1056, 2147483648
    %v1113 = vmul.f32 %v1109, 1.442695
    %v1114 = vpow.pop %v1113
    %v1115 = vmul.f32 %v1110, 1.442695
    %v1116 = vpow.pop %v1115
    %v1117 = vmul.f32 %v1111, 1.442695
    %v1118 = vpow.pop %v1117
    %v1119 = vmul.f32 %v1112, 1.442695
    %v1120 = vpow.pop %v1119
    %v1121 = vadd.f32 %v1114, 1.0
    %v1122 = vadd.f32 %v1116, 1.0
    %v1123 = vadd.f32 %v1118, 1.0
    %v1124 = vadd.f32 %v1120, 1.0
    %v1125 = vrcp.pop %v1121
    %v1126 = vmul.f32 1.0, %v1125
    %v1127 = vrcp.pop %v1122
    %v1128 = vmul.f32 1.0, %v1127
    %v1129 = vrcp.pop %v1123
    %v1130 = vmul.f32 1.0, %v1129
    %v1131 = vrcp.pop %v1124
    %v1132 = vmul.f32 1.0, %v1131
    %v1133 = vmul.f32 %v1098, %v904
    %v1134 = vmul.f32 %v1100, %v905
    %v1135 = vmul.f32 %v1102, %v906
    %v1136 = vmul.f32 %v1104, %v907
    %v1137 = vmul.f32 %v1074, %v1105
    %v1138 = vmul.f32 %v1076, %v1106
    %v1139 = vmul.f32 %v1078, %v1107
    %v1140 = vmul.f32 %v1080, %v1108
    %v1141 = vadd.f32 %v1133, %v1137
    %v1142 = vadd.f32 %v1134, %v1138
    %v1143 = vadd.f32 %v1135, %v1139
    %v1144 = vadd.f32 %v1136, %v1140
    %v1145 = vtanh.pop %v1141
    %v1146 = vtanh.pop %v1142
    %v1147 = vtanh.pop %v1143
    %v1148 = vtanh.pop %v1144
    %v1149 = vmul.f32 %v1126, %v1145
    %v1150 = vmul.f32 %v1128, %v1146
    %v1151 = vmul.f32 %v1130, %v1147
    %v1152 = vmul.f32 %v1132, %v1148
    %v1153 = vstv %s908
    %vm1154 = vcmp.lt.s32.totalorder %v1153, %v70
    %v1155 = vsel %vm1154, %v1149, %v900
    %v1156 = vsel %vm1154, %v1150, %v901
    %v1157 = vsel %vm1154, %v1151, %v902
    %v1158 = vsel %vm1154, %v1152, %v903
    %v1159 = vsel %vm1154, %v1141, %v904
    %v1160 = vsel %vm1154, %v1142, %v905
    %v1161 = vsel %vm1154, %v1143, %v906
    %v1162 = vsel %vm1154, %v1144, %v907
    %s1163 = sadd.s32 %s71, 4
    %s1164 = scalar_lea.vmem [#allocation5], 256
    %v1165 = vld [vmem:[%s1164] sm:$0xf]
    %v1166 = vld [vmem:[%s1164 + $0x4] sm:$0xf]
    %v1167 = vld [vmem:[%s1164 + $0x8] sm:$0xf]
    %v1168 = vld [vmem:[%s1164 + $0xc] sm:$0xf]
    %v1169 = vld [vmem:[%s1164 + $0x10] sm:$0xf]
    %v1170 = vld [vmem:[%s1164 + $0x14] sm:$0xf]
    %v1171 = vld [vmem:[%s1164 + $0x18] sm:$0xf]
    %v1172 = vld [vmem:[%s1164 + $0x1c] sm:$0xf]
    %v1173 = vld [vmem:[%s1164 + $0x20] sm:$0xf]
    %v1174 = vld [vmem:[%s1164 + $0x24] sm:$0xf]
    %v1175 = vld [vmem:[%s1164 + $0x28] sm:$0xf]
    %v1176 = vld [vmem:[%s1164 + $0x2c] sm:$0xf]
    %v1177 = vld [vmem:[%s1164 + $0x30] sm:$0xf]
    %v1178 = vld [vmem:[%s1164 + $0x34] sm:$0xf]
    %v1179 = vld [vmem:[%s1164 + $0x38] sm:$0xf]
    %v1180 = vld [vmem:[%s1164 + $0x3c] sm:$0xf]
    %v1181 = vunpack.c.l.bf16 %v1165
    %v1182 = vunpack.c.l.bf16 %v1166
    %v1183 = vunpack.c.l.bf16 %v1167
    %v1184 = vunpack.c.l.bf16 %v1168
    %v1185 = vunpack.c.l.bf16 %v1169
    %v1186 = vunpack.c.l.bf16 %v1170
    %v1187 = vunpack.c.l.bf16 %v1171
    %v1188 = vunpack.c.l.bf16 %v1172
    %v1189 = vunpack.c.l.bf16 %v1173
    %v1190 = vunpack.c.l.bf16 %v1174
    %v1191 = vunpack.c.l.bf16 %v1175
    %v1192 = vunpack.c.l.bf16 %v1176
    %v1193 = vunpack.c.l.bf16 %v1177
    %v1194 = vunpack.c.l.bf16 %v1178
    %v1195 = vunpack.c.l.bf16 %v1179
    %v1196 = vunpack.c.l.bf16 %v1180
    %v1197 = vpack.c.bf16 %v1156, %v1155
    %v1198 = vpack.c.bf16 %v1158, %v1157
    %1199 = vmatprep.subr.bf16.mxu0 0
    %1200 = vmatpush1.bf16.msra.mxu0 %v1197
    %1201 = vmatprep.subr.bf16.mxu0 0
    %1202 = vmatpush1.bf16.msra.mxu0 %v1198
    %1203 = vmatprep.subr.bf16.mxu0 0
    %1204 = vmatpush1.bf16.msra.mxu0 0
    %1205 = vmatprep.subr.bf16.mxu0 0
    %1206 = vmatpush1.bf16.msra.mxu0 0
    %1207 = vmatprep.subr.bf16.mxu0 0
    %1208 = vmatpush1.bf16.msra.mxu0 0
    %1209 = vmatprep.subr.bf16.mxu0 0
    %1210 = vmatpush1.bf16.msra.mxu0 0
    %1211 = vmatprep.subr.bf16.mxu0 0
    %1212 = vmatpush1.bf16.msra.mxu0 0
    %1213 = vmatprep.subr.bf16.mxu0 0
    %1214 = vmatpush1.bf16.msra.mxu0 0
    %1215 = vmatprep.subr.bf16.mxu0 0
    %1216 = vmatpush1.bf16.msra.mxu0 0
    %1217 = vmatprep.subr.bf16.mxu0 0
    %1218 = vmatpush1.bf16.msra.mxu0 0
    %1219 = vmatprep.subr.bf16.mxu0 0
    %1220 = vmatpush1.bf16.msra.mxu0 0
    %1221 = vmatprep.subr.bf16.mxu0 0
    %1222 = vmatpush1.bf16.msra.mxu0 0
    %1223 = vmatprep.subr.bf16.mxu0 0
    %1224 = vmatpush1.bf16.msra.mxu0 0
    %1225 = vmatprep.subr.bf16.mxu0 0
    %1226 = vmatpush1.bf16.msra.mxu0 0
    %1227 = vmatprep.subr.bf16.mxu0 0
    %1228 = vmatpush1.bf16.msra.mxu0 0
    %1229 = vmatprep.subr.bf16.mxu0 0
    %1230 = vmatpush1.bf16.msra.mxu0 0
    %1231 = vmatprep.mubr.bf16.mxu0 0
    %1232 = vmatmul.mubr.bf16.gmra.mrb[0].mxu0 %v156
    %v1233 = vpop.f32.mrb[0].mxu0
    %v1234 = vadd.f32 0.0, %v1233
    %v1235 = vpop.f32.mrb[0].mxu0
    %v1236 = vpop.f32.mrb[0].mxu0
    %v1237 = vadd.f32 0.0, %v1236
    %v1238 = vpop.f32.mrb[0].mxu0
    %1239 = vmatprep.mubr.bf16.mxu0 0
    %1240 = vmatmul.mubr.bf16.gmra.mrb[0].mxu0 %v159
    %v1241 = vpop.f32.mrb[0].mxu0
    %v1242 = vadd.f32 0.0, %v1241
    %v1243 = vpop.f32.mrb[0].mxu0
    %v1244 = vpop.f32.mrb[0].mxu0
    %v1245 = vadd.f32 0.0, %v1244
    %v1246 = vpop.f32.mrb[0].mxu0
    %1247 = vmatprep.mubr.bf16.mxu0 0
    %1248 = vmatmul.mubr.bf16.gmra.mrb[0].mxu0 %v162
    %v1249 = vpop.f32.mrb[0].mxu0
    %v1250 = vadd.f32 0.0, %v1249
    %v1251 = vpop.f32.mrb[0].mxu0
    %v1252 = vpop.f32.mrb[0].mxu0
    %v1253 = vadd.f32 0.0, %v1252
    %v1254 = vpop.f32.mrb[0].mxu0
    %1255 = vmatprep.mubr.bf16.mxu0 0
    %1256 = vmatmul.mubr.bf16.gmra.mrb[0].mxu0 %v165
    %v1257 = vpop.f32.mrb[0].mxu0
    %v1258 = vadd.f32 0.0, %v1257
    %v1259 = vpop.f32.mrb[0].mxu0
    %v1260 = vpop.f32.mrb[0].mxu0
    %v1261 = vadd.f32 0.0, %v1260
    %v1262 = vpop.f32.mrb[0].mxu0
    %1263 = vmatprep.mubr.bf16.mxu0 0
    %1264 = vmatmul.mubr.bf16.gmra.mrb[0].mxu0 %v168
    %v1265 = vpop.f32.mrb[0].mxu0
    %v1266 = vadd.f32 0.0, %v1265
    %v1267 = vpop.f32.mrb[0].mxu0
    %v1268 = vpop.f32.mrb[0].mxu0
    %v1269 = vadd.f32 0.0, %v1268
    %v1270 = vpop.f32.mrb[0].mxu0
    %1271 = vmatprep.mubr.bf16.mxu0 0
    %1272 = vmatmul.mubr.bf16.gmra.mrb[0].mxu0 %v171
    %v1273 = vpop.f32.mrb[0].mxu0
    %v1274 = vadd.f32 0.0, %v1273
    %v1275 = vpop.f32.mrb[0].mxu0
    %v1276 = vpop.f32.mrb[0].mxu0
    %v1277 = vadd.f32 0.0, %v1276
    %v1278 = vpop.f32.mrb[0].mxu0
    %1279 = vmatprep.mubr.bf16.mxu0 0
    %1280 = vmatmul.mubr.bf16.gmra.mrb[0].mxu0 %v174
    %v1281 = vpop.f32.mrb[0].mxu0
    %v1282 = vadd.f32 0.0, %v1281
    %v1283 = vpop.f32.mrb[0].mxu0
    %v1284 = vpop.f32.mrb[0].mxu0
    %v1285 = vadd.f32 0.0, %v1284
    %v1286 = vpop.f32.mrb[0].mxu0
    %1287 = vmatprep.mubr.bf16.mxu0 0
    %1288 = vmatmul.mubr.bf16.gmra.mrb[0].mxu0 %v177
    %v1289 = vpop.f32.mrb[0].mxu0
    %v1290 = vadd.f32 0.0, %v1289
    %v1291 = vpop.f32.mrb[0].mxu0
    %v1292 = vpop.f32.mrb[0].mxu0
    %v1293 = vadd.f32 0.0, %v1292
    %v1294 = vpop.f32.mrb[0].mxu0
    %1295 = vdwg.mxu0
    %v1296 = vadd.f32 %v1181, %v1234
    %v1297 = vadd.f32 %v1182, %v1237
    %v1298 = vadd.f32 %v1183, %v1242
    %v1299 = vadd.f32 %v1184, %v1245
    %v1300 = vadd.f32 %v1185, %v1250
    %v1301 = vadd.f32 %v1186, %v1253
    %v1302 = vadd.f32 %v1187, %v1258
    %v1303 = vadd.f32 %v1188, %v1261
    %v1304 = vadd.f32 %v1189, %v1266
    %v1305 = vadd.f32 %v1190, %v1269
    %v1306 = vadd.f32 %v1191, %v1274
    %v1307 = vadd.f32 %v1192, %v1277
    %v1308 = vadd.f32 %v1193, %v1282
    %v1309 = vadd.f32 %v1194, %v1285
    %v1310 = vadd.f32 %v1195, %v1290
    %v1311 = vadd.f32 %v1196, %v1293
    %v1312 = vxor.u32 %v1296, 2147483648
    %v1313 = vxor.u32 %v1297, 2147483648
    %v1314 = vxor.u32 %v1298, 2147483648
    %v1315 = vxor.u32 %v1299, 2147483648
    %v1316 = vmul.f32 %v1312, 1.442695
    %v1317 = vpow.pop %v1316
    %v1318 = vmul.f32 %v1313, 1.442695
    %v1319 = vpow.pop %v1318
    %v1320 = vmul.f32 %v1314, 1.442695
    %v1321 = vpow.pop %v1320
    %v1322 = vmul.f32 %v1315, 1.442695
    %v1323 = vpow.pop %v1322
    %v1324 = vadd.f32 %v1317, 1.0
    %v1325 = vadd.f32 %v1319, 1.0
    %v1326 = vadd.f32 %v1321, 1.0
    %v1327 = vadd.f32 %v1323, 1.0
    %v1328 = vrcp.pop %v1324
    %v1329 = vmul.f32 1.0, %v1328
    %v1330 = vrcp.pop %v1325
    %v1331 = vmul.f32 1.0, %v1330
    %v1332 = vrcp.pop %v1326
    %v1333 = vmul.f32 1.0, %v1332
    %v1334 = vrcp.pop %v1327
    %v1335 = vmul.f32 1.0, %v1334
    %v1336 = vxor.u32 %v1300, 2147483648
    %v1337 = vxor.u32 %v1301, 2147483648
    %v1338 = vxor.u32 %v1302, 2147483648
    %v1339 = vxor.u32 %v1303, 2147483648
    %v1340 = vmul.f32 %v1336, 1.442695
    %v1341 = vpow.pop %v1340
    %v1342 = vmul.f32 %v1337, 1.442695
    %v1343 = vpow.pop %v1342
    %v1344 = vmul.f32 %v1338, 1.442695
    %v1345 = vpow.pop %v1344
    %v1346 = vmul.f32 %v1339, 1.442695
    %v1347 = vpow.pop %v1346
    %v1348 = vadd.f32 %v1341, 1.0
    %v1349 = vadd.f32 %v1343, 1.0
    %v1350 = vadd.f32 %v1345, 1.0
    %v1351 = vadd.f32 %v1347, 1.0
    %v1352 = vrcp.pop %v1348
    %v1353 = vmul.f32 1.0, %v1352
    %v1354 = vrcp.pop %v1349
    %v1355 = vmul.f32 1.0, %v1354
    %v1356 = vrcp.pop %v1350
    %v1357 = vmul.f32 1.0, %v1356
    %v1358 = vrcp.pop %v1351
    %v1359 = vmul.f32 1.0, %v1358
    %v1360 = vtanh.pop %v1304
    %v1361 = vtanh.pop %v1305
    %v1362 = vtanh.pop %v1306
    %v1363 = vtanh.pop %v1307
    %v1364 = vxor.u32 %v1308, 2147483648
    %v1365 = vxor.u32 %v1309, 2147483648
    %v1366 = vxor.u32 %v1310, 2147483648
    %v1367 = vxor.u32 %v1311, 2147483648
    %v1368 = vmul.f32 %v1364, 1.442695
    %v1369 = vpow.pop %v1368
    %v1370 = vmul.f32 %v1365, 1.442695
    %v1371 = vpow.pop %v1370
    %v1372 = vmul.f32 %v1366, 1.442695
    %v1373 = vpow.pop %v1372
    %v1374 = vmul.f32 %v1367, 1.442695
    %v1375 = vpow.pop %v1374
    %v1376 = vadd.f32 %v1369, 1.0
    %v1377 = vadd.f32 %v1371, 1.0
    %v1378 = vadd.f32 %v1373, 1.0
    %v1379 = vadd.f32 %v1375, 1.0
    %v1380 = vrcp.pop %v1376
    %v1381 = vmul.f32 1.0, %v1380
    %v1382 = vrcp.pop %v1377
    %v1383 = vmul.f32 1.0, %v1382
    %v1384 = vrcp.pop %v1378
    %v1385 = vmul.f32 1.0, %v1384
    %v1386 = vrcp.pop %v1379
    %v1387 = vmul.f32 1.0, %v1386
    %v1388 = vmul.f32 %v1353, %v1159
    %v1389 = vmul.f32 %v1355, %v1160
    %v1390 = vmul.f32 %v1357, %v1161
    %v1391 = vmul.f32 %v1359, %v1162
    %v1392 = vmul.f32 %v1329, %v1360
    %v1393 = vmul.f32 %v1331, %v1361
    %v1394 = vmul.f32 %v1333, %v1362
    %v1395 = vmul.f32 %v1335, %v1363
    %v1396 = vadd.f32 %v1388, %v1392
    %v1397 = vadd.f32 %v1389, %v1393
    %v1398 = vadd.f32 %v1390, %v1394
    %v1399 = vadd.f32 %v1391, %v1395
    %v1400 = vtanh.pop %v1396
    %v1401 = vtanh.pop %v1397
    %v1402 = vtanh.pop %v1398
    %v1403 = vtanh.pop %v1399
    %v1404 = vmul.f32 %v1381, %v1400
    %v1405 = vmul.f32 %v1383, %v1401
    %v1406 = vmul.f32 %v1385, %v1402
    %v1407 = vmul.f32 %v1387, %v1403
    %v1408 = vstv %s1163
    %vm1409 = vcmp.lt.s32.totalorder %v1408, %v70
    %v1410 = vsel %vm1409, %v1404, %v1155
    %v1411 = vsel %vm1409, %v1405, %v1156
    %v1412 = vsel %vm1409, %v1406, %v1157
    %v1413 = vsel %vm1409, %v1407, %v1158
    %v1414 = vsel %vm1409, %v1396, %v1159
    %v1415 = vsel %vm1409, %v1397, %v1160
    %v1416 = vsel %vm1409, %v1398, %v1161
    %v1417 = vsel %vm1409, %v1399, %v1162
    %s1418 = sadd.s32 %s71, 5
    %s1419 = scalar_lea.vmem [#allocation5], 320
    %v1420 = vld [vmem:[%s1419] sm:$0xf]
    %v1421 = vld [vmem:[%s1419 + $0x4] sm:$0xf]
    %v1422 = vld [vmem:[%s1419 + $0x8] sm:$0xf]
    %v1423 = vld [vmem:[%s1419 + $0xc] sm:$0xf]
    %v1424 = vld [vmem:[%s1419 + $0x10] sm:$0xf]
    %v1425 = vld [vmem:[%s1419 + $0x14] sm:$0xf]
    %v1426 = vld [vmem:[%s1419 + $0x18] sm:$0xf]
    %v1427 = vld [vmem:[%s1419 + $0x1c] sm:$0xf]
    %v1428 = vld [vmem:[%s1419 + $0x20] sm:$0xf]
    %v1429 = vld [vmem:[%s1419 + $0x24] sm:$0xf]
    %v1430 = vld [vmem:[%s1419 + $0x28] sm:$0xf]
    %v1431 = vld [vmem:[%s1419 + $0x2c] sm:$0xf]
    %v1432 = vld [vmem:[%s1419 + $0x30] sm:$0xf]
    %v1433 = vld [vmem:[%s1419 + $0x34] sm:$0xf]
    %v1434 = vld [vmem:[%s1419 + $0x38] sm:$0xf]
    %v1435 = vld [vmem:[%s1419 + $0x3c] sm:$0xf]
    %v1436 = vunpack.c.l.bf16 %v1420
    %v1437 = vunpack.c.l.bf16 %v1421
    %v1438 = vunpack.c.l.bf16 %v1422
    %v1439 = vunpack.c.l.bf16 %v1423
    %v1440 = vunpack.c.l.bf16 %v1424
    %v1441 = vunpack.c.l.bf16 %v1425
    %v1442 = vunpack.c.l.bf16 %v1426
    %v1443 = vunpack.c.l.bf16 %v1427
    %v1444 = vunpack.c.l.bf16 %v1428
    %v1445 = vunpack.c.l.bf16 %v1429
    %v1446 = vunpack.c.l.bf16 %v1430
    %v1447 = vunpack.c.l.bf16 %v1431
    %v1448 = vunpack.c.l.bf16 %v1432
    %v1449 = vunpack.c.l.bf16 %v1433
    %v1450 = vunpack.c.l.bf16 %v1434
    %v1451 = vunpack.c.l.bf16 %v1435
    %v1452 = vpack.c.bf16 %v1411, %v1410
    %v1453 = vpack.c.bf16 %v1413, %v1412
    %1454 = vmatprep.subr.bf16.mxu0 0
    %1455 = vmatpush1.bf16.msra.mxu0 %v1452
    %1456 = vmatprep.subr.bf16.mxu0 0
    %1457 = vmatpush1.bf16.msra.mxu0 %v1453
    %1458 = vmatprep.subr.bf16.mxu0 0
    %1459 = vmatpush1.bf16.msra.mxu0 0
    %1460 = vmatprep.subr.bf16.mxu0 0
    %1461 = vmatpush1.bf16.msra.mxu0 0
    %1462 = vmatprep.subr.bf16.mxu0 0
    %1463 = vmatpush1.bf16.msra.mxu0 0
    %1464 = vmatprep.subr.bf16.mxu0 0
    %1465 = vmatpush1.bf16.msra.mxu0 0
    %1466 = vmatprep.subr.bf16.mxu0 0
    %1467 = vmatpush1.bf16.msra.mxu0 0
    %1468 = vmatprep.subr.bf16.mxu0 0
    %1469 = vmatpush1.bf16.msra.mxu0 0
    %1470 = vmatprep.subr.bf16.mxu0 0
    %1471 = vmatpush1.bf16.msra.mxu0 0
    %1472 = vmatprep.subr.bf16.mxu0 0
    %1473 = vmatpush1.bf16.msra.mxu0 0
    %1474 = vmatprep.subr.bf16.mxu0 0
    %1475 = vmatpush1.bf16.msra.mxu0 0
    %1476 = vmatprep.subr.bf16.mxu0 0
    %1477 = vmatpush1.bf16.msra.mxu0 0
    %1478 = vmatprep.subr.bf16.mxu0 0
    %1479 = vmatpush1.bf16.msra.mxu0 0
    %1480 = vmatprep.subr.bf16.mxu0 0
    %1481 = vmatpush1.bf16.msra.mxu0 0
    %1482 = vmatprep.subr.bf16.mxu0 0
    %1483 = vmatpush1.bf16.msra.mxu0 0
    %1484 = vmatprep.subr.bf16.mxu0 0
    %1485 = vmatpush1.bf16.msra.mxu0 0
    %1486 = vmatprep.mubr.bf16.mxu0 0
    %1487 = vmatmul.mubr.bf16.gmra.mrb[0].mxu0 %v156
    %v1488 = vpop.f32.mrb[0].mxu0
    %v1489 = vadd.f32 0.0, %v1488
    %v1490 = vpop.f32.mrb[0].mxu0
    %v1491 = vpop.f32.mrb[0].mxu0
    %v1492 = vadd.f32 0.0, %v1491
    %v1493 = vpop.f32.mrb[0].mxu0
    %1494 = vmatprep.mubr.bf16.mxu0 0
    %1495 = vmatmul.mubr.bf16.gmra.mrb[0].mxu0 %v159
    %v1496 = vpop.f32.mrb[0].mxu0
    %v1497 = vadd.f32 0.0, %v1496
    %v1498 = vpop.f32.mrb[0].mxu0
    %v1499 = vpop.f32.mrb[0].mxu0
    %v1500 = vadd.f32 0.0, %v1499
    %v1501 = vpop.f32.mrb[0].mxu0
    %1502 = vmatprep.mubr.bf16.mxu0 0
    %1503 = vmatmul.mubr.bf16.gmra.mrb[0].mxu0 %v162
    %v1504 = vpop.f32.mrb[0].mxu0
    %v1505 = vadd.f32 0.0, %v1504
    %v1506 = vpop.f32.mrb[0].mxu0
    %v1507 = vpop.f32.mrb[0].mxu0
    %v1508 = vadd.f32 0.0, %v1507
    %v1509 = vpop.f32.mrb[0].mxu0
    %1510 = vmatprep.mubr.bf16.mxu0 0
    %1511 = vmatmul.mubr.bf16.gmra.mrb[0].mxu0 %v165
    %v1512 = vpop.f32.mrb[0].mxu0
    %v1513 = vadd.f32 0.0, %v1512
    %v1514 = vpop.f32.mrb[0].mxu0
    %v1515 = vpop.f32.mrb[0].mxu0
    %v1516 = vadd.f32 0.0, %v1515
    %v1517 = vpop.f32.mrb[0].mxu0
    %1518 = vmatprep.mubr.bf16.mxu0 0
    %1519 = vmatmul.mubr.bf16.gmra.mrb[0].mxu0 %v168
    %v1520 = vpop.f32.mrb[0].mxu0
    %v1521 = vadd.f32 0.0, %v1520
    %v1522 = vpop.f32.mrb[0].mxu0
    %v1523 = vpop.f32.mrb[0].mxu0
    %v1524 = vadd.f32 0.0, %v1523
    %v1525 = vpop.f32.mrb[0].mxu0
    %1526 = vmatprep.mubr.bf16.mxu0 0
    %1527 = vmatmul.mubr.bf16.gmra.mrb[0].mxu0 %v171
    %v1528 = vpop.f32.mrb[0].mxu0
    %v1529 = vadd.f32 0.0, %v1528
    %v1530 = vpop.f32.mrb[0].mxu0
    %v1531 = vpop.f32.mrb[0].mxu0
    %v1532 = vadd.f32 0.0, %v1531
    %v1533 = vpop.f32.mrb[0].mxu0
    %1534 = vmatprep.mubr.bf16.mxu0 0
    %1535 = vmatmul.mubr.bf16.gmra.mrb[0].mxu0 %v174
    %v1536 = vpop.f32.mrb[0].mxu0
    %v1537 = vadd.f32 0.0, %v1536
    %v1538 = vpop.f32.mrb[0].mxu0
    %v1539 = vpop.f32.mrb[0].mxu0
    %v1540 = vadd.f32 0.0, %v1539
    %v1541 = vpop.f32.mrb[0].mxu0
    %1542 = vmatprep.mubr.bf16.mxu0 0
    %1543 = vmatmul.mubr.bf16.gmra.mrb[0].mxu0 %v177
    %v1544 = vpop.f32.mrb[0].mxu0
    %v1545 = vadd.f32 0.0, %v1544
    %v1546 = vpop.f32.mrb[0].mxu0
    %v1547 = vpop.f32.mrb[0].mxu0
    %v1548 = vadd.f32 0.0, %v1547
    %v1549 = vpop.f32.mrb[0].mxu0
    %1550 = vdwg.mxu0
    %v1551 = vadd.f32 %v1436, %v1489
    %v1552 = vadd.f32 %v1437, %v1492
    %v1553 = vadd.f32 %v1438, %v1497
    %v1554 = vadd.f32 %v1439, %v1500
    %v1555 = vadd.f32 %v1440, %v1505
    %v1556 = vadd.f32 %v1441, %v1508
    %v1557 = vadd.f32 %v1442, %v1513
    %v1558 = vadd.f32 %v1443, %v1516
    %v1559 = vadd.f32 %v1444, %v1521
    %v1560 = vadd.f32 %v1445, %v1524
    %v1561 = vadd.f32 %v1446, %v1529
    %v1562 = vadd.f32 %v1447, %v1532
    %v1563 = vadd.f32 %v1448, %v1537
    %v1564 = vadd.f32 %v1449, %v1540
    %v1565 = vadd.f32 %v1450, %v1545
    %v1566 = vadd.f32 %v1451, %v1548
    %v1567 = vxor.u32 %v1551, 2147483648
    %v1568 = vxor.u32 %v1552, 2147483648
    %v1569 = vxor.u32 %v1553, 2147483648
    %v1570 = vxor.u32 %v1554, 2147483648
    %v1571 = vmul.f32 %v1567, 1.442695
    %v1572 = vpow.pop %v1571
    %v1573 = vmul.f32 %v1568, 1.442695
    %v1574 = vpow.pop %v1573
    %v1575 = vmul.f32 %v1569, 1.442695
    %v1576 = vpow.pop %v1575
    %v1577 = vmul.f32 %v1570, 1.442695
    %v1578 = vpow.pop %v1577
    %v1579 = vadd.f32 %v1572, 1.0
    %v1580 = vadd.f32 %v1574, 1.0
    %v1581 = vadd.f32 %v1576, 1.0
    %v1582 = vadd.f32 %v1578, 1.0
    %v1583 = vrcp.pop %v1579
    %v1584 = vmul.f32 1.0, %v1583
    %v1585 = vrcp.pop %v1580
    %v1586 = vmul.f32 1.0, %v1585
    %v1587 = vrcp.pop %v1581
    %v1588 = vmul.f32 1.0, %v1587
    %v1589 = vrcp.pop %v1582
    %v1590 = vmul.f32 1.0, %v1589
    %v1591 = vxor.u32 %v1555, 2147483648
    %v1592 = vxor.u32 %v1556, 2147483648
    %v1593 = vxor.u32 %v1557, 2147483648
    %v1594 = vxor.u32 %v1558, 2147483648
    %v1595 = vmul.f32 %v1591, 1.442695
    %v1596 = vpow.pop %v1595
    %v1597 = vmul.f32 %v1592, 1.442695
    %v1598 = vpow.pop %v1597
    %v1599 = vmul.f32 %v1593, 1.442695
    %v1600 = vpow.pop %v1599
    %v1601 = vmul.f32 %v1594, 1.442695
    %v1602 = vpow.pop %v1601
    %v1603 = vadd.f32 %v1596, 1.0
    %v1604 = vadd.f32 %v1598, 1.0
    %v1605 = vadd.f32 %v1600, 1.0
    %v1606 = vadd.f32 %v1602, 1.0
    %v1607 = vrcp.pop %v1603
    %v1608 = vmul.f32 1.0, %v1607
    %v1609 = vrcp.pop %v1604
    %v1610 = vmul.f32 1.0, %v1609
    %v1611 = vrcp.pop %v1605
    %v1612 = vmul.f32 1.0, %v1611
    %v1613 = vrcp.pop %v1606
    %v1614 = vmul.f32 1.0, %v1613
    %v1615 = vtanh.pop %v1559
    %v1616 = vtanh.pop %v1560
    %v1617 = vtanh.pop %v1561
    %v1618 = vtanh.pop %v1562
    %v1619 = vxor.u32 %v1563, 2147483648
    %v1620 = vxor.u32 %v1564, 2147483648
    %v1621 = vxor.u32 %v1565, 2147483648
    %v1622 = vxor.u32 %v1566, 2147483648
    %v1623 = vmul.f32 %v1619, 1.442695
    %v1624 = vpow.pop %v1623
    %v1625 = vmul.f32 %v1620, 1.442695
    %v1626 = vpow.pop %v1625
    %v1627 = vmul.f32 %v1621, 1.442695
    %v1628 = vpow.pop %v1627
    %v1629 = vmul.f32 %v1622, 1.442695
    %v1630 = vpow.pop %v1629
    %v1631 = vadd.f32 %v1624, 1.0
    %v1632 = vadd.f32 %v1626, 1.0
    %v1633 = vadd.f32 %v1628, 1.0
    %v1634 = vadd.f32 %v1630, 1.0
    %v1635 = vrcp.pop %v1631
    %v1636 = vmul.f32 1.0, %v1635
    %v1637 = vrcp.pop %v1632
    %v1638 = vmul.f32 1.0, %v1637
    %v1639 = vrcp.pop %v1633
    %v1640 = vmul.f32 1.0, %v1639
    %v1641 = vrcp.pop %v1634
    %v1642 = vmul.f32 1.0, %v1641
    %v1643 = vmul.f32 %v1608, %v1414
    %v1644 = vmul.f32 %v1610, %v1415
    %v1645 = vmul.f32 %v1612, %v1416
    %v1646 = vmul.f32 %v1614, %v1417
    %v1647 = vmul.f32 %v1584, %v1615
    %v1648 = vmul.f32 %v1586, %v1616
    %v1649 = vmul.f32 %v1588, %v1617
    %v1650 = vmul.f32 %v1590, %v1618
    %v1651 = vadd.f32 %v1643, %v1647
    %v1652 = vadd.f32 %v1644, %v1648
    %v1653 = vadd.f32 %v1645, %v1649
    %v1654 = vadd.f32 %v1646, %v1650
    %v1655 = vtanh.pop %v1651
    %v1656 = vtanh.pop %v1652
    %v1657 = vtanh.pop %v1653
    %v1658 = vtanh.pop %v1654
    %v1659 = vmul.f32 %v1636, %v1655
    %v1660 = vmul.f32 %v1638, %v1656
    %v1661 = vmul.f32 %v1640, %v1657
    %v1662 = vmul.f32 %v1642, %v1658
    %v1663 = vstv %s1418
    %vm1664 = vcmp.lt.s32.totalorder %v1663, %v70
    %v1665 = vsel %vm1664, %v1659, %v1410
    %v1666 = vsel %vm1664, %v1660, %v1411
    %v1667 = vsel %vm1664, %v1661, %v1412
    %v1668 = vsel %vm1664, %v1662, %v1413
    %v1669 = vsel %vm1664, %v1651, %v1414
    %v1670 = vsel %vm1664, %v1652, %v1415
    %v1671 = vsel %vm1664, %v1653, %v1416
    %v1672 = vsel %vm1664, %v1654, %v1417
    %s1673 = sadd.s32 %s71, 6
    %s1674 = scalar_lea.vmem [#allocation5], 384
    %v1675 = vld [vmem:[%s1674] sm:$0xf]
    %v1676 = vld [vmem:[%s1674 + $0x4] sm:$0xf]
    %v1677 = vld [vmem:[%s1674 + $0x8] sm:$0xf]
    %v1678 = vld [vmem:[%s1674 + $0xc] sm:$0xf]
    %v1679 = vld [vmem:[%s1674 + $0x10] sm:$0xf]
    %v1680 = vld [vmem:[%s1674 + $0x14] sm:$0xf]
    %v1681 = vld [vmem:[%s1674 + $0x18] sm:$0xf]
    %v1682 = vld [vmem:[%s1674 + $0x1c] sm:$0xf]
    %v1683 = vld [vmem:[%s1674 + $0x20] sm:$0xf]
    %v1684 = vld [vmem:[%s1674 + $0x24] sm:$0xf]
    %v1685 = vld [vmem:[%s1674 + $0x28] sm:$0xf]
    %v1686 = vld [vmem:[%s1674 + $0x2c] sm:$0xf]
    %v1687 = vld [vmem:[%s1674 + $0x30] sm:$0xf]
    %v1688 = vld [vmem:[%s1674 + $0x34] sm:$0xf]
    %v1689 = vld [vmem:[%s1674 + $0x38] sm:$0xf]
    %v1690 = vld [vmem:[%s1674 + $0x3c] sm:$0xf]
    %v1691 = vunpack.c.l.bf16 %v1675
    %v1692 = vunpack.c.l.bf16 %v1676
    %v1693 = vunpack.c.l.bf16 %v1677
    %v1694 = vunpack.c.l.bf16 %v1678
    %v1695 = vunpack.c.l.bf16 %v1679
    %v1696 = vunpack.c.l.bf16 %v1680
    %v1697 = vunpack.c.l.bf16 %v1681
    %v1698 = vunpack.c.l.bf16 %v1682
    %v1699 = vunpack.c.l.bf16 %v1683
    %v1700 = vunpack.c.l.bf16 %v1684
    %v1701 = vunpack.c.l.bf16 %v1685
    %v1702 = vunpack.c.l.bf16 %v1686
    %v1703 = vunpack.c.l.bf16 %v1687
    %v1704 = vunpack.c.l.bf16 %v1688
    %v1705 = vunpack.c.l.bf16 %v1689
    %v1706 = vunpack.c.l.bf16 %v1690
    %v1707 = vpack.c.bf16 %v1666, %v1665
    %v1708 = vpack.c.bf16 %v1668, %v1667
    %1709 = vmatprep.subr.bf16.mxu0 0
    %1710 = vmatpush1.bf16.msra.mxu0 %v1707
    %1711 = vmatprep.subr.bf16.mxu0 0
    %1712 = vmatpush1.bf16.msra.mxu0 %v1708
    %1713 = vmatprep.subr.bf16.mxu0 0
    %1714 = vmatpush1.bf16.msra.mxu0 0
    %1715 = vmatprep.subr.bf16.mxu0 0
    %1716 = vmatpush1.bf16.msra.mxu0 0
    %1717 = vmatprep.subr.bf16.mxu0 0
    %1718 = vmatpush1.bf16.msra.mxu0 0
    %1719 = vmatprep.subr.bf16.mxu0 0
    %1720 = vmatpush1.bf16.msra.mxu0 0
    %1721 = vmatprep.subr.bf16.mxu0 0
    %1722 = vmatpush1.bf16.msra.mxu0 0
    %1723 = vmatprep.subr.bf16.mxu0 0
    %1724 = vmatpush1.bf16.msra.mxu0 0
    %1725 = vmatprep.subr.bf16.mxu0 0
    %1726 = vmatpush1.bf16.msra.mxu0 0
    %1727 = vmatprep.subr.bf16.mxu0 0
    %1728 = vmatpush1.bf16.msra.mxu0 0
    %1729 = vmatprep.subr.bf16.mxu0 0
    %1730 = vmatpush1.bf16.msra.mxu0 0
    %1731 = vmatprep.subr.bf16.mxu0 0
    %1732 = vmatpush1.bf16.msra.mxu0 0
    %1733 = vmatprep.subr.bf16.mxu0 0
    %1734 = vmatpush1.bf16.msra.mxu0 0
    %1735 = vmatprep.subr.bf16.mxu0 0
    %1736 = vmatpush1.bf16.msra.mxu0 0
    %1737 = vmatprep.subr.bf16.mxu0 0
    %1738 = vmatpush1.bf16.msra.mxu0 0
    %1739 = vmatprep.subr.bf16.mxu0 0
    %1740 = vmatpush1.bf16.msra.mxu0 0
    %1741 = vmatprep.mubr.bf16.mxu0 0
    %1742 = vmatmul.mubr.bf16.gmra.mrb[0].mxu0 %v156
    %v1743 = vpop.f32.mrb[0].mxu0
    %v1744 = vadd.f32 0.0, %v1743
    %v1745 = vpop.f32.mrb[0].mxu0
    %v1746 = vpop.f32.mrb[0].mxu0
    %v1747 = vadd.f32 0.0, %v1746
    %v1748 = vpop.f32.mrb[0].mxu0
    %1749 = vmatprep.mubr.bf16.mxu0 0
    %1750 = vmatmul.mubr.bf16.gmra.mrb[0].mxu0 %v159
    %v1751 = vpop.f32.mrb[0].mxu0
    %v1752 = vadd.f32 0.0, %v1751
    %v1753 = vpop.f32.mrb[0].mxu0
    %v1754 = vpop.f32.mrb[0].mxu0
    %v1755 = vadd.f32 0.0, %v1754
    %v1756 = vpop.f32.mrb[0].mxu0
    %1757 = vmatprep.mubr.bf16.mxu0 0
    %1758 = vmatmul.mubr.bf16.gmra.mrb[0].mxu0 %v162
    %v1759 = vpop.f32.mrb[0].mxu0
    %v1760 = vadd.f32 0.0, %v1759
    %v1761 = vpop.f32.mrb[0].mxu0
    %v1762 = vpop.f32.mrb[0].mxu0
    %v1763 = vadd.f32 0.0, %v1762
    %v1764 = vpop.f32.mrb[0].mxu0
    %1765 = vmatprep.mubr.bf16.mxu0 0
    %1766 = vmatmul.mubr.bf16.gmra.mrb[0].mxu0 %v165
    %v1767 = vpop.f32.mrb[0].mxu0
    %v1768 = vadd.f32 0.0, %v1767
    %v1769 = vpop.f32.mrb[0].mxu0
    %v1770 = vpop.f32.mrb[0].mxu0
    %v1771 = vadd.f32 0.0, %v1770
    %v1772 = vpop.f32.mrb[0].mxu0
    %1773 = vmatprep.mubr.bf16.mxu0 0
    %1774 = vmatmul.mubr.bf16.gmra.mrb[0].mxu0 %v168
    %v1775 = vpop.f32.mrb[0].mxu0
    %v1776 = vadd.f32 0.0, %v1775
    %v1777 = vpop.f32.mrb[0].mxu0
    %v1778 = vpop.f32.mrb[0].mxu0
    %v1779 = vadd.f32 0.0, %v1778
    %v1780 = vpop.f32.mrb[0].mxu0
    %1781 = vmatprep.mubr.bf16.mxu0 0
    %1782 = vmatmul.mubr.bf16.gmra.mrb[0].mxu0 %v171
    %v1783 = vpop.f32.mrb[0].mxu0
    %v1784 = vadd.f32 0.0, %v1783
    %v1785 = vpop.f32.mrb[0].mxu0
    %v1786 = vpop.f32.mrb[0].mxu0
    %v1787 = vadd.f32 0.0, %v1786
    %v1788 = vpop.f32.mrb[0].mxu0
    %1789 = vmatprep.mubr.bf16.mxu0 0
    %1790 = vmatmul.mubr.bf16.gmra.mrb[0].mxu0 %v174
    %v1791 = vpop.f32.mrb[0].mxu0
    %v1792 = vadd.f32 0.0, %v1791
    %v1793 = vpop.f32.mrb[0].mxu0
    %v1794 = vpop.f32.mrb[0].mxu0
    %v1795 = vadd.f32 0.0, %v1794
    %v1796 = vpop.f32.mrb[0].mxu0
    %1797 = vmatprep.mubr.bf16.mxu0 0
    %1798 = vmatmul.mubr.bf16.gmra.mrb[0].mxu0 %v177
    %v1799 = vpop.f32.mrb[0].mxu0
    %v1800 = vadd.f32 0.0, %v1799
    %v1801 = vpop.f32.mrb[0].mxu0
    %v1802 = vpop.f32.mrb[0].mxu0
    %v1803 = vadd.f32 0.0, %v1802
    %v1804 = vpop.f32.mrb[0].mxu0
    %1805 = vdwg.mxu0
    %v1806 = vadd.f32 %v1691, %v1744
    %v1807 = vadd.f32 %v1692, %v1747
    %v1808 = vadd.f32 %v1693, %v1752
    %v1809 = vadd.f32 %v1694, %v1755
    %v1810 = vadd.f32 %v1695, %v1760
    %v1811 = vadd.f32 %v1696, %v1763
    %v1812 = vadd.f32 %v1697, %v1768
    %v1813 = vadd.f32 %v1698, %v1771
    %v1814 = vadd.f32 %v1699, %v1776
    %v1815 = vadd.f32 %v1700, %v1779
    %v1816 = vadd.f32 %v1701, %v1784
    %v1817 = vadd.f32 %v1702, %v1787
    %v1818 = vadd.f32 %v1703, %v1792
    %v1819 = vadd.f32 %v1704, %v1795
    %v1820 = vadd.f32 %v1705, %v1800
    %v1821 = vadd.f32 %v1706, %v1803
    %v1822 = vxor.u32 %v1806, 2147483648
    %v1823 = vxor.u32 %v1807, 2147483648
    %v1824 = vxor.u32 %v1808, 2147483648
    %v1825 = vxor.u32 %v1809, 2147483648
    %v1826 = vmul.f32 %v1822, 1.442695
    %v1827 = vpow.pop %v1826
    %v1828 = vmul.f32 %v1823, 1.442695
    %v1829 = vpow.pop %v1828
    %v1830 = vmul.f32 %v1824, 1.442695
    %v1831 = vpow.pop %v1830
    %v1832 = vmul.f32 %v1825, 1.442695
    %v1833 = vpow.pop %v1832
    %v1834 = vadd.f32 %v1827, 1.0
    %v1835 = vadd.f32 %v1829, 1.0
    %v1836 = vadd.f32 %v1831, 1.0
    %v1837 = vadd.f32 %v1833, 1.0
    %v1838 = vrcp.pop %v1834
    %v1839 = vmul.f32 1.0, %v1838
    %v1840 = vrcp.pop %v1835
    %v1841 = vmul.f32 1.0, %v1840
    %v1842 = vrcp.pop %v1836
    %v1843 = vmul.f32 1.0, %v1842
    %v1844 = vrcp.pop %v1837
    %v1845 = vmul.f32 1.0, %v1844
    %v1846 = vxor.u32 %v1810, 2147483648
    %v1847 = vxor.u32 %v1811, 2147483648
    %v1848 = vxor.u32 %v1812, 2147483648
    %v1849 = vxor.u32 %v1813, 2147483648
    %v1850 = vmul.f32 %v1846, 1.442695
    %v1851 = vpow.pop %v1850
    %v1852 = vmul.f32 %v1847, 1.442695
    %v1853 = vpow.pop %v1852
    %v1854 = vmul.f32 %v1848, 1.442695
    %v1855 = vpow.pop %v1854
    %v1856 = vmul.f32 %v1849, 1.442695
    %v1857 = vpow.pop %v1856
    %v1858 = vadd.f32 %v1851, 1.0
    %v1859 = vadd.f32 %v1853, 1.0
    %v1860 = vadd.f32 %v1855, 1.0
    %v1861 = vadd.f32 %v1857, 1.0
    %v1862 = vrcp.pop %v1858
    %v1863 = vmul.f32 1.0, %v1862
    %v1864 = vrcp.pop %v1859
    %v1865 = vmul.f32 1.0, %v1864
    %v1866 = vrcp.pop %v1860
    %v1867 = vmul.f32 1.0, %v1866
    %v1868 = vrcp.pop %v1861
    %v1869 = vmul.f32 1.0, %v1868
    %v1870 = vtanh.pop %v1814
    %v1871 = vtanh.pop %v1815
    %v1872 = vtanh.pop %v1816
    %v1873 = vtanh.pop %v1817
    %v1874 = vxor.u32 %v1818, 2147483648
    %v1875 = vxor.u32 %v1819, 2147483648
    %v1876 = vxor.u32 %v1820, 2147483648
    %v1877 = vxor.u32 %v1821, 2147483648
    %v1878 = vmul.f32 %v1874, 1.442695
    %v1879 = vpow.pop %v1878
    %v1880 = vmul.f32 %v1875, 1.442695
    %v1881 = vpow.pop %v1880
    %v1882 = vmul.f32 %v1876, 1.442695
    %v1883 = vpow.pop %v1882
    %v1884 = vmul.f32 %v1877, 1.442695
    %v1885 = vpow.pop %v1884
    %v1886 = vadd.f32 %v1879, 1.0
    %v1887 = vadd.f32 %v1881, 1.0
    %v1888 = vadd.f32 %v1883, 1.0
    %v1889 = vadd.f32 %v1885, 1.0
    %v1890 = vrcp.pop %v1886
    %v1891 = vmul.f32 1.0, %v1890
    %v1892 = vrcp.pop %v1887
    %v1893 = vmul.f32 1.0, %v1892
    %v1894 = vrcp.pop %v1888
    %v1895 = vmul.f32 1.0, %v1894
    %v1896 = vrcp.pop %v1889
    %v1897 = vmul.f32 1.0, %v1896
    %v1898 = vmul.f32 %v1863, %v1669
    %v1899 = vmul.f32 %v1865, %v1670
    %v1900 = vmul.f32 %v1867, %v1671
    %v1901 = vmul.f32 %v1869, %v1672
    %v1902 = vmul.f32 %v1839, %v1870
    %v1903 = vmul.f32 %v1841, %v1871
    %v1904 = vmul.f32 %v1843, %v1872
    %v1905 = vmul.f32 %v1845, %v1873
    %v1906 = vadd.f32 %v1898, %v1902
    %v1907 = vadd.f32 %v1899, %v1903
    %v1908 = vadd.f32 %v1900, %v1904
    %v1909 = vadd.f32 %v1901, %v1905
    %v1910 = vtanh.pop %v1906
    %v1911 = vtanh.pop %v1907
    %v1912 = vtanh.pop %v1908
    %v1913 = vtanh.pop %v1909
    %v1914 = vmul.f32 %v1891, %v1910
    %v1915 = vmul.f32 %v1893, %v1911
    %v1916 = vmul.f32 %v1895, %v1912
    %v1917 = vmul.f32 %v1897, %v1913
    %v1918 = vstv %s1673
    %vm1919 = vcmp.lt.s32.totalorder %v1918, %v70
    %v1920 = vsel %vm1919, %v1914, %v1665
    %v1921 = vsel %vm1919, %v1915, %v1666
    %v1922 = vsel %vm1919, %v1916, %v1667
    %v1923 = vsel %vm1919, %v1917, %v1668
    %v1924 = vsel %vm1919, %v1906, %v1669
    %v1925 = vsel %vm1919, %v1907, %v1670
    %v1926 = vsel %vm1919, %v1908, %v1671
    %v1927 = vsel %vm1919, %v1909, %v1672
    %s1928 = sadd.s32 %s71, 7
    %s1929 = scalar_lea.vmem [#allocation5], 448
    %v1930 = vld [vmem:[%s1929] sm:$0xf]
    %v1931 = vld [vmem:[%s1929 + $0x4] sm:$0xf]
    %v1932 = vld [vmem:[%s1929 + $0x8] sm:$0xf]
    %v1933 = vld [vmem:[%s1929 + $0xc] sm:$0xf]
    %v1934 = vld [vmem:[%s1929 + $0x10] sm:$0xf]
    %v1935 = vld [vmem:[%s1929 + $0x14] sm:$0xf]
    %v1936 = vld [vmem:[%s1929 + $0x18] sm:$0xf]
    %v1937 = vld [vmem:[%s1929 + $0x1c] sm:$0xf]
    %v1938 = vld [vmem:[%s1929 + $0x20] sm:$0xf]
    %v1939 = vld [vmem:[%s1929 + $0x24] sm:$0xf]
    %v1940 = vld [vmem:[%s1929 + $0x28] sm:$0xf]
    %v1941 = vld [vmem:[%s1929 + $0x2c] sm:$0xf]
    %v1942 = vld [vmem:[%s1929 + $0x30] sm:$0xf]
    %v1943 = vld [vmem:[%s1929 + $0x34] sm:$0xf]
    %v1944 = vld [vmem:[%s1929 + $0x38] sm:$0xf]
    %v1945 = vld [vmem:[%s1929 + $0x3c] sm:$0xf]
    %v1946 = vunpack.c.l.bf16 %v1930
    %v1947 = vunpack.c.l.bf16 %v1931
    %v1948 = vunpack.c.l.bf16 %v1932
    %v1949 = vunpack.c.l.bf16 %v1933
    %v1950 = vunpack.c.l.bf16 %v1934
    %v1951 = vunpack.c.l.bf16 %v1935
    %v1952 = vunpack.c.l.bf16 %v1936
    %v1953 = vunpack.c.l.bf16 %v1937
    %v1954 = vunpack.c.l.bf16 %v1938
    %v1955 = vunpack.c.l.bf16 %v1939
    %v1956 = vunpack.c.l.bf16 %v1940
    %v1957 = vunpack.c.l.bf16 %v1941
    %v1958 = vunpack.c.l.bf16 %v1942
    %v1959 = vunpack.c.l.bf16 %v1943
    %v1960 = vunpack.c.l.bf16 %v1944
    %v1961 = vunpack.c.l.bf16 %v1945
    %v1962 = vpack.c.bf16 %v1921, %v1920
    %v1963 = vpack.c.bf16 %v1923, %v1922
    %1964 = vmatprep.subr.bf16.mxu0 0
    %1965 = vmatpush1.bf16.msra.mxu0 %v1962
    %1966 = vmatprep.subr.bf16.mxu0 0
    %1967 = vmatpush1.bf16.msra.mxu0 %v1963
    %1968 = vmatprep.subr.bf16.mxu0 0
    %1969 = vmatpush1.bf16.msra.mxu0 0
    %1970 = vmatprep.subr.bf16.mxu0 0
    %1971 = vmatpush1.bf16.msra.mxu0 0
    %1972 = vmatprep.subr.bf16.mxu0 0
    %1973 = vmatpush1.bf16.msra.mxu0 0
    %1974 = vmatprep.subr.bf16.mxu0 0
    %1975 = vmatpush1.bf16.msra.mxu0 0
    %1976 = vmatprep.subr.bf16.mxu0 0
    %1977 = vmatpush1.bf16.msra.mxu0 0
    %1978 = vmatprep.subr.bf16.mxu0 0
    %1979 = vmatpush1.bf16.msra.mxu0 0
    %1980 = vmatprep.subr.bf16.mxu0 0
    %1981 = vmatpush1.bf16.msra.mxu0 0
    %1982 = vmatprep.subr.bf16.mxu0 0
    %1983 = vmatpush1.bf16.msra.mxu0 0
    %1984 = vmatprep.subr.bf16.mxu0 0
    %1985 = vmatpush1.bf16.msra.mxu0 0
    %1986 = vmatprep.subr.bf16.mxu0 0
    %1987 = vmatpush1.bf16.msra.mxu0 0
    %1988 = vmatprep.subr.bf16.mxu0 0
    %1989 = vmatpush1.bf16.msra.mxu0 0
    %1990 = vmatprep.subr.bf16.mxu0 0
    %1991 = vmatpush1.bf16.msra.mxu0 0
    %1992 = vmatprep.subr.bf16.mxu0 0
    %1993 = vmatpush1.bf16.msra.mxu0 0
    %1994 = vmatprep.subr.bf16.mxu0 0
    %1995 = vmatpush1.bf16.msra.mxu0 0
    %1996 = vmatprep.mubr.bf16.mxu0 0
    %1997 = vmatmul.mubr.bf16.gmra.mrb[0].mxu0 %v156
    %v1998 = vpop.f32.mrb[0].mxu0
    %v1999 = vadd.f32 0.0, %v1998
    %v2000 = vpop.f32.mrb[0].mxu0
    %v2001 = vpop.f32.mrb[0].mxu0
    %v2002 = vadd.f32 0.0, %v2001
    %v2003 = vpop.f32.mrb[0].mxu0
    %2004 = vmatprep.mubr.bf16.mxu0 0
    %2005 = vmatmul.mubr.bf16.gmra.mrb[0].mxu0 %v159
    %v2006 = vpop.f32.mrb[0].mxu0
    %v2007 = vadd.f32 0.0, %v2006
    %v2008 = vpop.f32.mrb[0].mxu0
    %v2009 = vpop.f32.mrb[0].mxu0
    %v2010 = vadd.f32 0.0, %v2009
    %v2011 = vpop.f32.mrb[0].mxu0
    %2012 = vmatprep.mubr.bf16.mxu0 0
    %2013 = vmatmul.mubr.bf16.gmra.mrb[0].mxu0 %v162
    %v2014 = vpop.f32.mrb[0].mxu0
    %v2015 = vadd.f32 0.0, %v2014
    %v2016 = vpop.f32.mrb[0].mxu0
    %v2017 = vpop.f32.mrb[0].mxu0
    %v2018 = vadd.f32 0.0, %v2017
    %v2019 = vpop.f32.mrb[0].mxu0
    %2020 = vmatprep.mubr.bf16.mxu0 0
    %2021 = vmatmul.mubr.bf16.gmra.mrb[0].mxu0 %v165
    %v2022 = vpop.f32.mrb[0].mxu0
    %v2023 = vadd.f32 0.0, %v2022
    %v2024 = vpop.f32.mrb[0].mxu0
    %v2025 = vpop.f32.mrb[0].mxu0
    %v2026 = vadd.f32 0.0, %v2025
    %v2027 = vpop.f32.mrb[0].mxu0
    %2028 = vmatprep.mubr.bf16.mxu0 0
    %2029 = vmatmul.mubr.bf16.gmra.mrb[0].mxu0 %v168
    %v2030 = vpop.f32.mrb[0].mxu0
    %v2031 = vadd.f32 0.0, %v2030
    %v2032 = vpop.f32.mrb[0].mxu0
    %v2033 = vpop.f32.mrb[0].mxu0
    %v2034 = vadd.f32 0.0, %v2033
    %v2035 = vpop.f32.mrb[0].mxu0
    %2036 = vmatprep.mubr.bf16.mxu0 0
    %2037 = vmatmul.mubr.bf16.gmra.mrb[0].mxu0 %v171
    %v2038 = vpop.f32.mrb[0].mxu0
    %v2039 = vadd.f32 0.0, %v2038
    %v2040 = vpop.f32.mrb[0].mxu0
    %v2041 = vpop.f32.mrb[0].mxu0
    %v2042 = vadd.f32 0.0, %v2041
    %v2043 = vpop.f32.mrb[0].mxu0
    %2044 = vmatprep.mubr.bf16.mxu0 0
    %2045 = vmatmul.mubr.bf16.gmra.mrb[0].mxu0 %v174
    %v2046 = vpop.f32.mrb[0].mxu0
    %v2047 = vadd.f32 0.0, %v2046
    %v2048 = vpop.f32.mrb[0].mxu0
    %v2049 = vpop.f32.mrb[0].mxu0
    %v2050 = vadd.f32 0.0, %v2049
    %v2051 = vpop.f32.mrb[0].mxu0
    %2052 = vmatprep.mubr.bf16.mxu0 0
    %2053 = vmatmul.mubr.bf16.gmra.mrb[0].mxu0 %v177
    %v2054 = vpop.f32.mrb[0].mxu0
    %v2055 = vadd.f32 0.0, %v2054
    %v2056 = vpop.f32.mrb[0].mxu0
    %v2057 = vpop.f32.mrb[0].mxu0
    %v2058 = vadd.f32 0.0, %v2057
    %v2059 = vpop.f32.mrb[0].mxu0
    %2060 = vdwg.mxu0
    %v2061 = vadd.f32 %v1946, %v1999
    %v2062 = vadd.f32 %v1947, %v2002
    %v2063 = vadd.f32 %v1948, %v2007
    %v2064 = vadd.f32 %v1949, %v2010
    %v2065 = vadd.f32 %v1950, %v2015
    %v2066 = vadd.f32 %v1951, %v2018
    %v2067 = vadd.f32 %v1952, %v2023
    %v2068 = vadd.f32 %v1953, %v2026
    %v2069 = vadd.f32 %v1954, %v2031
    %v2070 = vadd.f32 %v1955, %v2034
    %v2071 = vadd.f32 %v1956, %v2039
    %v2072 = vadd.f32 %v1957, %v2042
    %v2073 = vadd.f32 %v1958, %v2047
    %v2074 = vadd.f32 %v1959, %v2050
    %v2075 = vadd.f32 %v1960, %v2055
    %v2076 = vadd.f32 %v1961, %v2058
    %v2077 = vxor.u32 %v2061, 2147483648
    %v2078 = vxor.u32 %v2062, 2147483648
    %v2079 = vxor.u32 %v2063, 2147483648
    %v2080 = vxor.u32 %v2064, 2147483648
    %v2081 = vmul.f32 %v2077, 1.442695
    %v2082 = vpow.pop %v2081
    %v2083 = vmul.f32 %v2078, 1.442695
    %v2084 = vpow.pop %v2083
    %v2085 = vmul.f32 %v2079, 1.442695
    %v2086 = vpow.pop %v2085
    %v2087 = vmul.f32 %v2080, 1.442695
    %v2088 = vpow.pop %v2087
    %v2089 = vadd.f32 %v2082, 1.0
    %v2090 = vadd.f32 %v2084, 1.0
    %v2091 = vadd.f32 %v2086, 1.0
    %v2092 = vadd.f32 %v2088, 1.0
    %v2093 = vrcp.pop %v2089
    %v2094 = vmul.f32 1.0, %v2093
    %v2095 = vrcp.pop %v2090
    %v2096 = vmul.f32 1.0, %v2095
    %v2097 = vrcp.pop %v2091
    %v2098 = vmul.f32 1.0, %v2097
    %v2099 = vrcp.pop %v2092
    %v2100 = vmul.f32 1.0, %v2099
    %v2101 = vxor.u32 %v2065, 2147483648
    %v2102 = vxor.u32 %v2066, 2147483648
    %v2103 = vxor.u32 %v2067, 2147483648
    %v2104 = vxor.u32 %v2068, 2147483648
    %v2105 = vmul.f32 %v2101, 1.442695
    %v2106 = vpow.pop %v2105
    %v2107 = vmul.f32 %v2102, 1.442695
    %v2108 = vpow.pop %v2107
    %v2109 = vmul.f32 %v2103, 1.442695
    %v2110 = vpow.pop %v2109
    %v2111 = vmul.f32 %v2104, 1.442695
    %v2112 = vpow.pop %v2111
    %v2113 = vadd.f32 %v2106, 1.0
    %v2114 = vadd.f32 %v2108, 1.0
    %v2115 = vadd.f32 %v2110, 1.0
    %v2116 = vadd.f32 %v2112, 1.0
    %v2117 = vrcp.pop %v2113
    %v2118 = vmul.f32 1.0, %v2117
    %v2119 = vrcp.pop %v2114
    %v2120 = vmul.f32 1.0, %v2119
    %v2121 = vrcp.pop %v2115
    %v2122 = vmul.f32 1.0, %v2121
    %v2123 = vrcp.pop %v2116
    %v2124 = vmul.f32 1.0, %v2123
    %v2125 = vtanh.pop %v2069
    %v2126 = vtanh.pop %v2070
    %v2127 = vtanh.pop %v2071
    %v2128 = vtanh.pop %v2072
    %v2129 = vxor.u32 %v2073, 2147483648
    %v2130 = vxor.u32 %v2074, 2147483648
    %v2131 = vxor.u32 %v2075, 2147483648
    %v2132 = vxor.u32 %v2076, 2147483648
    %v2133 = vmul.f32 %v2129, 1.442695
    %v2134 = vpow.pop %v2133
    %v2135 = vmul.f32 %v2130, 1.442695
    %v2136 = vpow.pop %v2135
    %v2137 = vmul.f32 %v2131, 1.442695
    %v2138 = vpow.pop %v2137
    %v2139 = vmul.f32 %v2132, 1.442695
    %v2140 = vpow.pop %v2139
    %v2141 = vadd.f32 %v2134, 1.0
    %v2142 = vadd.f32 %v2136, 1.0
    %v2143 = vadd.f32 %v2138, 1.0
    %v2144 = vadd.f32 %v2140, 1.0
    %v2145 = vrcp.pop %v2141
    %v2146 = vmul.f32 1.0, %v2145
    %v2147 = vrcp.pop %v2142
    %v2148 = vmul.f32 1.0, %v2147
    %v2149 = vrcp.pop %v2143
    %v2150 = vmul.f32 1.0, %v2149
    %v2151 = vrcp.pop %v2144
    %v2152 = vmul.f32 1.0, %v2151
    %v2153 = vmul.f32 %v2118, %v1924
    %v2154 = vmul.f32 %v2120, %v1925
    %v2155 = vmul.f32 %v2122, %v1926
    %v2156 = vmul.f32 %v2124, %v1927
    %v2157 = vmul.f32 %v2094, %v2125
    %v2158 = vmul.f32 %v2096, %v2126
    %v2159 = vmul.f32 %v2098, %v2127
    %v2160 = vmul.f32 %v2100, %v2128
    %v2161 = vadd.f32 %v2153, %v2157
    %v2162 = vadd.f32 %v2154, %v2158
    %v2163 = vadd.f32 %v2155, %v2159
    %v2164 = vadd.f32 %v2156, %v2160
    %v2165 = vtanh.pop %v2161
    %v2166 = vtanh.pop %v2162
    %v2167 = vtanh.pop %v2163
    %v2168 = vtanh.pop %v2164
    %v2169 = vmul.f32 %v2146, %v2165
    %v2170 = vmul.f32 %v2148, %v2166
    %v2171 = vmul.f32 %v2150, %v2167
    %v2172 = vmul.f32 %v2152, %v2168
    %v2173 = vstv %s1928
    %vm2174 = vcmp.lt.s32.totalorder %v2173, %v70
    %v2175 = vsel %vm2174, %v2169, %v1920
    %v2176 = vsel %vm2174, %v2170, %v1921
    %v2177 = vsel %vm2174, %v2171, %v1922
    %v2178 = vsel %vm2174, %v2172, %v1923
    %v2179 = vsel %vm2174, %v2161, %v1924
    %v2180 = vsel %vm2174, %v2162, %v1925
    %v2181 = vsel %vm2174, %v2163, %v1926
    %v2182 = vsel %vm2174, %v2164, %v1927
    %2183 = vst [vmem:[#allocation2] sm:$0xff] %v2175
    %2184 = vst [vmem:[#allocation2 + $0x8] sm:$0xff] %v2176
    %2185 = vst [vmem:[#allocation2 + $0x10] sm:$0xff] %v2177
    %2186 = vst [vmem:[#allocation2 + $0x18] sm:$0xff] %v2178
    %2187 = vst [vmem:[#allocation3] sm:$0xff] %v2179
    %2188 = vst [vmem:[#allocation3 + $0x8] sm:$0xff] %v2180
    %2189 = vst [vmem:[#allocation3 + $0x10] sm:$0xff] %v2181
    %2190 = vst [vmem:[#allocation3 + $0x18] sm:$0xff] %v2182
    // Predicated region
    $region30: #{tpu_custom_call.1} parent=1 // pred_check
      %p2191 = pneg %p38
    $region31: #{tpu_custom_call.1} parent=1 // pred_check_branch
      %2193 = sbr.rel (%p2191) target = $region33
    $region32: #{tpu_custom_call.1} parent=1 // pred_region
      %v2194 = vld [vmem:[%s3] sm:$0x1]
      %v2195 = vld [vmem:[#allocation4] sm:$0x1]
      %2197 = vset.pattern.permute.xlu0 0
      %2198 = vperm.xlu0 %2197, %v2195
      %v2199 = vpop.permute.xlu0 %2198
      %v2201 = vlaneseq
      %v2202 = vshrl.u32 %v2201, 7
      %v2203 = vsub.s32 0, %v2202
      %v2204 = vrot.slane %v2199, %v2203
      %v2206 = vsel %vm154, %v2194, 0
      %2208 = vmatprep.subr.mxu0 0.0
      %2209 = vmatpush1.msra.mxu0 %v2175
      %2210 = vmatprep.subr.mxu0 0.0
      %2211 = vmatpush1.msra.mxu0 %v2176
      %2212 = vmatprep.subr.mxu0 0.0
      %2213 = vmatpush1.msra.mxu0 %v2177
      %2214 = vmatprep.subr.mxu0 0.0
      %2215 = vmatpush1.msra.mxu0 %v2178
      %2216 = vmatprep.subr.mxu0 0.0
      %2217 = vmatpush1.msra.mxu0 0.0
      %2218 = vmatprep.subr.mxu0 0.0
      %2219 = vmatpush1.msra.mxu0 0.0
      %2220 = vmatprep.subr.mxu0 0.0
      %2221 = vmatpush1.msra.mxu0 0.0
      %2222 = vmatprep.subr.mxu0 0.0
      %2223 = vmatpush1.msra.mxu0 0.0
      %2224 = vmatprep.subr.mxu0 0.0
      %2225 = vmatpush1.msra.mxu0 0.0
      %2226 = vmatprep.subr.mxu0 0.0
      %2227 = vmatpush1.msra.mxu0 0.0
      %2228 = vmatprep.subr.mxu0 0.0
      %2229 = vmatpush1.msra.mxu0 0.0
      %2230 = vmatprep.subr.mxu0 0.0
      %2231 = vmatpush1.msra.mxu0 0.0
      %2232 = vmatprep.subr.mxu0 0.0
      %2233 = vmatpush1.msra.mxu0 0.0
      %2234 = vmatprep.subr.mxu0 0.0
      %2235 = vmatpush1.msra.mxu0 0.0
      %2236 = vmatprep.subr.mxu0 0.0
      %2237 = vmatpush1.msra.mxu0 0.0
      %2238 = vmatprep.subr.mxu0 0.0
      %2239 = vmatpush1.msra.mxu0 0.0
      %2240 = vmatprep.subr.mxu0 0.0
      %2241 = vmatpush1.msra.mxu0 0.0
      %2242 = vmatprep.subr.mxu0 0.0
      %2243 = vmatpush1.msra.mxu0 0.0
      %2244 = vmatprep.subr.mxu0 0.0
      %2245 = vmatpush1.msra.mxu0 0.0
      %2246 = vmatprep.subr.mxu0 0.0
      %2247 = vmatpush1.msra.mxu0 0.0
      %2248 = vmatprep.subr.mxu0 0.0
      %2249 = vmatpush1.msra.mxu0 0.0
      %2250 = vmatprep.subr.mxu0 0.0
      %2251 = vmatpush1.msra.mxu0 0.0
      %2252 = vmatprep.subr.mxu0 0.0
      %2253 = vmatpush1.msra.mxu0 0.0
      %2254 = vmatprep.subr.mxu0 0.0
      %2255 = vmatpush1.msra.mxu0 0.0
      %2256 = vmatprep.subr.mxu0 0.0
      %2257 = vmatpush1.msra.mxu0 0.0
      %2258 = vmatprep.subr.mxu0 0.0
      %2259 = vmatpush1.msra.mxu0 0.0
      %2260 = vmatprep.subr.mxu0 0.0
      %2261 = vmatpush1.msra.mxu0 0.0
      %2262 = vmatprep.subr.mxu0 0.0
      %2263 = vmatpush1.msra.mxu0 0.0
      %2264 = vmatprep.subr.mxu0 0.0
      %2265 = vmatpush1.msra.mxu0 0.0
      %2266 = vmatprep.subr.mxu0 0.0
      %2267 = vmatpush1.msra.mxu0 0.0
      %2268 = vmatprep.subr.mxu0 0.0
      %2269 = vmatpush1.msra.mxu0 0.0
      %2270 = vmatprep.subr.mxu0 0.0
      %2271 = vmatpush1.msra.mxu0 0.0
      %2272 = vmatprep.mubr.f32.mxu0 0.0
      %2273 = vmatmul.mubr.f32.gmra.mrb[0].mxu0 %v2206
      %v2274 = vpop.f32.mrb[0].mxu0
      %v2275 = vadd.f32 %v2204, %v2274
      %v2276 = vpop.f32.mrb[0].mxu0
      %2277 = vdwg.mxu0
      %v2278 = vxor.u32 %v2275, 2147483648
      %v2279 = vmul.f32 %v2278, 1.442695
      %v2280 = vpow.pop %v2279
      %v2281 = vadd.f32 %v2280, 1.0
      %v2282 = vrcp.pop %v2281
      %v2283 = vmul.f32 1.0, %v2282
      %2284 = vst [vmem:[#allocation8] sm:$0x1] %v2283
    $region33: #{tpu_custom_call.1} parent=1 // pred_fallthru
      _
    // Predicated region
    $region34: #{tpu_custom_call.1} parent=1 // pred_check
      _
    $region35: #{tpu_custom_call.1} parent=1 // pred_check_branch
      %2286 = sbr.rel (0) target = $region37
    $region36: #{tpu_custom_call.1} parent=1 // pred_region
      %s2288 = ssub.s32 16, 16
      %2289 = vsyncadd [#allocation7], %s2288
      %s2291 = sshll.u32 [#allocation8], 4
      %s2292 = int_to_ptr.vmem [resolvable:$true] %s2291
      %2294 = dma.vmem_to_hbm [thread:$0]  %s2292, 16, %s5, [#allocation7]
    $region37: #{tpu_custom_call.1} parent=1 // pred_fallthru
      _
    // Predicated region
    $region38: #{tpu_custom_call.1} parent=1 // pred_check
      _
    $region39: #{tpu_custom_call.1} parent=1 // pred_check_branch
      %2296 = sbr.rel (0) target = $region41
    $region40: #{tpu_custom_call.1} parent=1 // pred_region
      %2297 = dma.done [#allocation7], 16
    $region41: #{tpu_custom_call.1} parent=1 // pred_fallthru
      _
    %2298 = vsyncpa [#allocation6], 1
    %2299 = vsyncpa [#allocation7], 1

</llo_original>
